<compile_context>
chip_gen: v7x
topology: tpu7x:2x2x1
jax: 0.10.0
libtpu: 0.0.40
codegen_flags: <defaults>
</compile_context>

<pallas_src>
import functools

import jax
import jax.numpy as jnp
from jax.experimental import pallas as pl
from jax.experimental.pallas import tpu as pltpu

LANES = 128
ACC_ROWS = 256                        # (256,128) f32 accumulator = 32 vregs, 128 KiB
PALLAS_MIN_ELEMS = 64 * 1024          # below this, XLA's fused reduce wins
TARGET_BLOCK_BYTES = 2 * 1024 * 1024  # ~2 MiB DMAs: >=85% of HBM roofline on v5e/v6e
TARGET_BLOCK_BYTES_V7 = 4 * 1024 * 1024  # 3.2 TB/s HBM needs bigger blocks


def _num_parallel_cores():
    """2 only where a 'parallel' grid axis is split across TensorCores (v7x)."""
    try:
        kind = jax.devices()[0].device_kind.lower()
    except Exception:
        return 1
    return 2 if ("v7" in kind or "7x" in kind) else 1


def _sumsq_kernel(x_ref, o_ref, acc_ref, *, block_rows, acc_rows, bpc, n_rows,
                  need_mask):
    """Accumulate sum(x**2) of this block into a small VMEM scratch; emit the
    (8,128) partial only on the last reduction step for this core."""
    c = pl.program_id(0)       # core split            ("parallel")
    k = pl.program_id(1)       # reduction over blocks ("arbitrary")

    @pl.when(k == 0)
    def _():
        acc_ref[...] = jnp.zeros_like(acc_ref)

    folds = block_rows // acc_rows          # static
    block_row0 = (c * bpc + k) * block_rows

    def add_chunks(masked):
        # Process the block in acc_rows-row chunks: upcast / mask / square at
        # ~128-384 KiB granularity, pure VPU adds into the resident scratch.
        for f in range(folds):
            r0 = f * acc_rows               # static chunk offset
            xc = x_ref[pl.ds(r0, acc_rows), :].astype(jnp.float32)
            if masked:
                rows = (block_row0 + r0
                        + jax.lax.broadcasted_iota(jnp.int32, (acc_rows, LANES), 0))
                xc = jnp.where(rows < n_rows, xc, 0.0)
            acc_ref[...] += xc * xc

    if need_mask:
        is_edge = block_row0 + block_rows > n_rows   # partial last / clamped overhang

        @pl.when(jnp.logical_not(is_edge))
        def _():
            add_chunks(False)

        @pl.when(is_edge)
        def _():
            add_chunks(True)
    else:
        add_chunks(False)

    @pl.when(k == bpc - 1)
    def _():
        # Fold (acc_rows,128) -> (8,128) with VPU adds and write the tiny output.
        a = acc_ref[...].reshape(acc_rows // 8, 8, LANES).sum(axis=0)
        o_ref[...] = a[None, :, :]


def _sumsq_pallas(w):
    """sum(w**2) over all elements (float32) via a tiled Pallas reduction."""
    n = int(w.size)
    flat = w.reshape(-1)

    n_body = (n // LANES) * LANES
    tail_sumsq = None
    if n_body != n:
        # <128-element ragged tail stays in plain JAX: no padded HBM replica.
        tail = flat[n_body:].astype(jnp.float32)
        tail_sumsq = jnp.sum(tail * tail)
        flat = flat[:n_body]
    n_rows = n_body // LANES
    x2d = flat.reshape(n_rows, LANES)       # lane-dense; free when n % 128 == 0

    itemsize = jnp.dtype(w.dtype).itemsize
    nc = _num_parallel_cores()
    target_bytes = TARGET_BLOCK_BYTES_V7 if nc == 2 else TARGET_BLOCK_BYTES
    # Constant-byte blocks across dtypes, multiple of ACC_ROWS (hence of the
    # sublane packing 8/16/32 for f32/bf16/int8).
    target_rows = max(ACC_ROWS,
                      (target_bytes // (LANES * itemsize) // ACC_ROWS) * ACC_ROWS)
    block_rows = min(target_rows, (n_rows // ACC_ROWS) * ACC_ROWS)

    blocks_total = pl.cdiv(n_rows, block_rows)
    if blocks_total < nc:
        nc = 1
    bpc = pl.cdiv(blocks_total, nc)                     # blocks per core
    need_mask = (nc * bpc * block_rows) != n_rows

    kernel = functools.partial(
        _sumsq_kernel,
        block_rows=block_rows,
        acc_rows=ACC_ROWS,
        bpc=bpc,
        n_rows=n_rows,
        need_mask=need_mask,
    )

    def x_index_map(c, k):
        # Clamp so an overhanging step on the second core re-reads a valid
        # block; its (fully masked) contribution is zero.
        return (jnp.minimum(c * bpc + k, blocks_total - 1), 0)

    partials = pl.pallas_call(
        kernel,
        out_shape=jax.ShapeDtypeStruct((nc, 8, LANES), jnp.float32),
        grid_spec=pltpu.PrefetchScalarGridSpec(
            num_scalar_prefetch=0,
            grid=(nc, bpc),
            in_specs=[pl.BlockSpec((block_rows, LANES), x_index_map)],
            out_specs=pl.BlockSpec((1, 8, LANES), lambda c, k: (c, 0, 0)),
            scratch_shapes=[pltpu.VMEM((ACC_ROWS, LANES), jnp.float32)],
        ),
        compiler_params=pltpu.CompilerParams(
            dimension_semantics=("parallel", "arbitrary")),
    )(x2d)

    sumsq = jnp.sum(partials)               # tiny epilogue: <= nc * 4 KiB
    if tail_sumsq is not None:
        sumsq = sumsq + tail_sumsq
    return sumsq


def _l2_norm(w):
    """||w||_2 of the flattened tensor."""
    n = int(w.size)
    if n >= PALLAS_MIN_ELEMS:
        sumsq = _sumsq_pallas(w)
    else:
        xf = w.astype(jnp.float32)
        sumsq = jnp.sum(xf * xf)
    return jnp.sqrt(sumsq)


def regularization_forward(weight_list, weight_decay, p=2):
    """Equivalent of Regularization.forward: weight_decay * sum_i ||w_i||_p."""
    reg_loss = jnp.float32(0.0)
    for _name, w in weight_list:
        if p == 2:
            reg_loss = reg_loss + _l2_norm(w)
        else:
            # TODO(synk): p != 2 norms stay in plain JAX (module defaults to p=2).
            xf = jnp.abs(w.astype(jnp.float32))
            reg_loss = reg_loss + jnp.sum(xf ** p) ** (1.0 / p)
    return jnp.float32(weight_decay) * reg_loss


def _reference(weight_list, weight_decay, p=2):
    total = jnp.float32(0.0)
    for _name, w in weight_list:
        xf = w.astype(jnp.float32)
        if p == 2:
            total = total + jnp.sqrt(jnp.sum(xf * xf))
        else:
            total = total + jnp.sum(jnp.abs(xf) ** p) ** (1.0 / p)
    return jnp.float32(weight_decay) * total


if __name__ == "__main__":
    # Deterministic synthetic "model" parameters.  Only params whose name
    # contains "weight" participate (biases excluded), matching get_weight()
    # in the PyTorch module.  Conv weights are OIHW like PyTorch.
    key = jax.random.PRNGKey(0)
    ks = jax.random.split(key, 6)
    weight_list = [
        # tiny params -> plain-JAX path (kernel dispatch would dominate)
        ("conv1.weight", 0.10 * jax.random.normal(ks[0], (8, 4, 3, 3), jnp.float32)),
        ("bn1.weight", 1.0 + 0.01 * jax.random.normal(ks[1], (8,), jnp.float32)),
        ("fc0.weight", 0.05 * jax.random.normal(ks[2], (64, 32), jnp.float32)),
        # Pallas path, ragged numel -> <128-elem tail in plain JAX, masked edge block
        ("fc1.weight", 0.05 * jax.random.normal(ks[3], (257, 259), jnp.float32)),
        # Pallas path, bf16 storage -> in-kernel chunked upcast, f32 accumulation
        ("fc2.weight",
         (0.05 * jax.random.normal(ks[4], (512, 272), jnp.float32)).astype(jnp.bfloat16)),
        # Pallas path, multi-block grid with exact block multiple -> mask-free path
        ("fc3.weight", 0.02 * jax.random.normal(ks[5], (1024, 1024), jnp.float32)),
    ]
    weight_decay = 1e-3

    loss = regularization_forward(weight_list, weight_decay)
    loss = jax.block_until_ready(loss)

    ref = jax.block_until_ready(_reference(weight_list, weight_decay))
    assert jnp.allclose(loss, ref, rtol=1e-4, atol=1e-6), (loss, ref)
    print("KERNEL_OK")
</pallas_src>

<mosaic_0001>
module attributes {stable_mosaic.version = 11 : i64} {
  func.func @_sumsq_kernel(%arg0: i32, %arg1: i32, %arg2: memref<512x128xf32, #tpu.memory_space<vmem>>, %arg3: memref<1x8x128xf32, #tpu.memory_space<vmem>>, %arg4: memref<256x128xf32, #tpu.memory_space<vmem>>) attributes {dimension_semantics = [#tpu.dimension_semantics<parallel>, #tpu.dimension_semantics<arbitrary>], iteration_bounds = array<i64: 1, 2>, scalar_prefetch = 0 : i64, scratch_operands = 1 : i64, tpu.core_type = #tpu.core_type<tc>, window_params = [{transform_indices = @transform_0, window_bounds = array<i64: 512, 128>}, {transform_indices = @transform_1, window_bounds = array<i64: 1, 8, 128>}]} {
    %c0_i32 = arith.constant 0 : i32
    %0 = arith.cmpi eq, %arg1, %c0_i32 : i32
    %1 = arith.extui %0 : i1 to i32
    %c0_i32_0 = arith.constant 0 : i32
    %2 = arith.cmpi ne, %1, %c0_i32_0 : i32
    scf.if %2 {
      %cst = arith.constant 0.000000e+00 : f32
      %16 = vector.broadcast %cst : f32 to vector<256x128xf32>
      %c0 = arith.constant 0 : index
      %c0_5 = arith.constant 0 : index
      %17 = vector.load %arg4[%c0, %c0_5] : memref<256x128xf32, #tpu.memory_space<vmem>>, vector<256x128xf32>
      tpu.vector_store %arg4[%c0, %c0_5], %16 {strides = array<i32>} : memref<256x128xf32, #tpu.memory_space<vmem>>, vector<256x128xf32>,
    } else {
    }
    %c2_i32 = arith.constant 2 : i32
    %3 = arith.muli %arg0, %c2_i32 : i32
    %4 = arith.addi %3, %arg1 : i32
    %c512_i32 = arith.constant 512 : i32
    %5 = arith.muli %4, %c512_i32 : i32
    %c512_i32_1 = arith.constant 512 : i32
    %6 = arith.addi %5, %c512_i32_1 : i32
    %c520_i32 = arith.constant 520 : i32
    %7 = arith.cmpi sgt, %6, %c520_i32 : i32
    %true = arith.constant true
    %8 = arith.xori %7, %true : i1
    %9 = arith.extui %8 : i1 to i32
    %c0_i32_2 = arith.constant 0 : i32
    %10 = arith.cmpi ne, %9, %c0_i32_2 : i32
    scf.if %10 {
      %c0 = arith.constant 0 : index
      %c0_5 = arith.constant 0 : index
      %16 = vector.load %arg2[%c0, %c0_5] : memref<512x128xf32, #tpu.memory_space<vmem>>, vector<256x128xf32>
      %c0_6 = arith.constant 0 : index
      %c0_7 = arith.constant 0 : index
      %17 = vector.load %arg4[%c0_6, %c0_7] : memref<256x128xf32, #tpu.memory_space<vmem>>, vector<256x128xf32>
      %18 = arith.mulf %16, %16 : vector<256x128xf32>
      %19 = arith.addf %17, %18 : vector<256x128xf32>
      %c0_8 = arith.constant 0 : index
      %c0_9 = arith.constant 0 : index
      %20 = vector.load %arg4[%c0_8, %c0_9] : memref<256x128xf32, #tpu.memory_space<vmem>>, vector<256x128xf32>
      tpu.vector_store %arg4[%c0_8, %c0_9], %19 {strides = array<i32>} : memref<256x128xf32, #tpu.memory_space<vmem>>, vector<256x128xf32>,
      %c256 = arith.constant 256 : index
      %c0_10 = arith.constant 0 : index
      %21 = vector.load %arg2[%c256, %c0_10] : memref<512x128xf32, #tpu.memory_space<vmem>>, vector<256x128xf32>
      %c0_11 = arith.constant 0 : index
      %c0_12 = arith.constant 0 : index
      %22 = vector.load %arg4[%c0_11, %c0_12] : memref<256x128xf32, #tpu.memory_space<vmem>>, vector<256x128xf32>
      %23 = arith.mulf %21, %21 : vector<256x128xf32>
      %24 = arith.addf %22, %23 : vector<256x128xf32>
      %c0_13 = arith.constant 0 : index
      %c0_14 = arith.constant 0 : index
      %25 = vector.load %arg4[%c0_13, %c0_14] : memref<256x128xf32, #tpu.memory_space<vmem>>, vector<256x128xf32>
      tpu.vector_store %arg4[%c0_13, %c0_14], %24 {strides = array<i32>} : memref<256x128xf32, #tpu.memory_space<vmem>>, vector<256x128xf32>,
    } else {
    }
    %11 = arith.extui %7 : i1 to i32
    %c0_i32_3 = arith.constant 0 : i32
    %12 = arith.cmpi ne, %11, %c0_i32_3 : i32
    scf.if %12 {
      %c0 = arith.constant 0 : index
      %c0_5 = arith.constant 0 : index
      %16 = vector.load %arg2[%c0, %c0_5] : memref<512x128xf32, #tpu.memory_space<vmem>>, vector<256x128xf32>
      %c0_i32_6 = arith.constant 0 : i32
      %17 = arith.addi %5, %c0_i32_6 : i32
      %18 = tpu.iota {dimensions = array<i32: 0>} : vector<256x128xi32>
      %19 = vector.broadcast %17 : i32 to vector<256x128xi32>
      %20 = arith.addi %19, %18 : vector<256x128xi32>
      %c520_i32_7 = arith.constant 520 : i32
      %21 = vector.broadcast %c520_i32_7 : i32 to vector<256x128xi32>
      %22 = arith.cmpi slt, %20, %21 : vector<256x128xi32>
      %cst = arith.constant 0.000000e+00 : f32
      %23 = vector.broadcast %cst : f32 to vector<256x128xf32>
      %24 = arith.select %22, %16, %23 : vector<256x128xi1>, vector<256x128xf32>
      %c0_8 = arith.constant 0 : index
      %c0_9 = arith.constant 0 : index
      %25 = vector.load %arg4[%c0_8, %c0_9] : memref<256x128xf32, #tpu.memory_space<vmem>>, vector<256x128xf32>
      %26 = arith.mulf %24, %24 : vector<256x128xf32>
      %27 = arith.addf %25, %26 : vector<256x128xf32>
      %c0_10 = arith.constant 0 : index
      %c0_11 = arith.constant 0 : index
      %28 = vector.load %arg4[%c0_10, %c0_11] : memref<256x128xf32, #tpu.memory_space<vmem>>, vector<256x128xf32>
      tpu.vector_store %arg4[%c0_10, %c0_11], %27 {strides = array<i32>} : memref<256x128xf32, #tpu.memory_space<vmem>>, vector<256x128xf32>,
      %c256 = arith.constant 256 : index
      %c0_12 = arith.constant 0 : index
      %29 = vector.load %arg2[%c256, %c0_12] : memref<512x128xf32, #tpu.memory_space<vmem>>, vector<256x128xf32>
      %c256_i32 = arith.constant 256 : i32
      %30 = arith.addi %5, %c256_i32 : i32
      %31 = tpu.iota {dimensions = array<i32: 0>} : vector<256x128xi32>
      %32 = vector.broadcast %30 : i32 to vector<256x128xi32>
      %33 = arith.addi %32, %31 : vector<256x128xi32>
      %c520_i32_13 = arith.constant 520 : i32
      %34 = vector.broadcast %c520_i32_13 : i32 to vector<256x128xi32>
      %35 = arith.cmpi slt, %33, %34 : vector<256x128xi32>
      %cst_14 = arith.constant 0.000000e+00 : f32
      %36 = vector.broadcast %cst_14 : f32 to vector<256x128xf32>
      %37 = arith.select %35, %29, %36 : vector<256x128xi1>, vector<256x128xf32>
      %c0_15 = arith.constant 0 : index
      %c0_16 = arith.constant 0 : index
      %38 = vector.load %arg4[%c0_15, %c0_16] : memref<256x128xf32, #tpu.memory_space<vmem>>, vector<256x128xf32>
      %39 = arith.mulf %37, %37 : vector<256x128xf32>
      %40 = arith.addf %38, %39 : vector<256x128xf32>
      %c0_17 = arith.constant 0 : index
      %c0_18 = arith.constant 0 : index
      %41 = vector.load %arg4[%c0_17, %c0_18] : memref<256x128xf32, #tpu.memory_space<vmem>>, vector<256x128xf32>
      tpu.vector_store %arg4[%c0_17, %c0_18], %40 {strides = array<i32>} : memref<256x128xf32, #tpu.memory_space<vmem>>, vector<256x128xf32>,
    } else {
    }
    %c1_i32 = arith.constant 1 : i32
    %13 = arith.cmpi eq, %arg1, %c1_i32 : i32
    %14 = arith.extui %13 : i1 to i32
    %c0_i32_4 = arith.constant 0 : i32
    %15 = arith.cmpi ne, %14, %c0_i32_4 : i32
    scf.if %15 {
      %c0 = arith.constant 0 : index
      %c0_5 = arith.constant 0 : index
      %16 = vector.load %arg4[%c0, %c0_5] : memref<256x128xf32, #tpu.memory_space<vmem>>, vector<256x128xf32>
      %17 = vector.shape_cast %16 : vector<256x128xf32> to vector<32x8x128xf32>
      %cst = arith.constant dense<0.000000e+00> : vector<8x128xf32>
      %18 = vector.multi_reduction <add>, %17, %cst [0] : vector<32x8x128xf32> to vector<8x128xf32>
      %19 = vector.shape_cast %18 : vector<8x128xf32> to vector<1x8x128xf32>
      %c0_6 = arith.constant 0 : index
      %c0_7 = arith.constant 0 : index
      %c0_8 = arith.constant 0 : index
      %20 = vector.load %arg3[%c0_6, %c0_7, %c0_8] : memref<1x8x128xf32, #tpu.memory_space<vmem>>, vector<1x8x128xf32>
      tpu.vector_store %arg3[%c0_6, %c0_7, %c0_8], %19 {strides = array<i32>} : memref<1x8x128xf32, #tpu.memory_space<vmem>>, vector<1x8x128xf32>,
    } else {
    }
    return
  }
  func.func @transform_0(%arg0: i32, %arg1: i32) -> (i32, i32) {
    %c2_i32 = arith.constant 2 : i32
    %0 = arith.muli %arg0, %c2_i32 : i32
    %1 = arith.addi %0, %arg1 : i32
    %c1_i32 = arith.constant 1 : i32
    %2 = arith.minsi %1, %c1_i32 : i32
    %c0_i32 = arith.constant 0 : i32
    %c0_i32_0 = arith.constant 0 : i32
    return %2, %c0_i32 : i32, i32
  }
  func.func @transform_1(%arg0: i32, %arg1: i32) -> (i32, i32, i32) {
    %c0_i32 = arith.constant 0 : i32
    %c0_i32_0 = arith.constant 0 : i32
    %c0_i32_1 = arith.constant 0 : i32
    return %arg0, %c0_i32, %c0_i32_0 : i32, i32, i32
  }
}

</mosaic_0001>

<llo_original>
// kernel: tpu_custom_call.1
$region0: #{tpu_custom_call.1}
  #allocation0 [shape = 'u32[]', space=smem, size = 0x4, offset = 0x4, fixed_abs, tag = 'smem constant byte address 0x4 - core index']
  #allocation1 [shape = 'u32[144,128]{1,0:T(1,128)}', space=vmem, size = 0x12000, scoped, tag = 'internal scratch']
  #allocation2 [shape = 'f32[256,128]{1,0:T(8,128)}', space=vmem, size = 0x20000, scoped, tag = 'scratch operand']
  %s0 = inlined_call_operand.hbm [shape: f32[520,128], index: 0, kind: input, shape index: {}]
  %s1 = inlined_call_operand.hbm [shape: f32[1,8,128], index: 1, kind: output, shape index: {}]
  %s2 = sld [smem:[#allocation0]]
  $region57: #{tpu_custom_call.1} parent=0
    _
  %s4 = ssub.s32 1, %s2
  %s5 = scalar_select 0, %s4, %s2
  $region1: #{tpu_custom_call.1} parent=0
    #allocation3 [shape = 'u8[524288]{0}', space=vmem, size = 0x80000, scoped, tag = 'input window, operand 0']
    #allocation4 [shape = 's32[2]{0}', space=sflag, size = 0x8, scoped, tag = 'scoped memory for tpu_custom_call.1']
    #allocation5 [shape = 's32[2]{0}', space=sflag, size = 0x8, scoped, tag = 'scoped memory for tpu_custom_call.1']
    #allocation6 [shape = 'u8[4096]{0}', space=vmem, size = 0x1000, scoped, tag = 'output window, operand 0, single buffered']
    %6 = vsyncpa [#allocation4], 0
    %s7 = scalar_lea.sflag [#allocation4], 1
    %8 = vsyncpa %s7, 0
    %9 = vsyncpa [#allocation5], 0
    loop: start=0, step=1, limit=4
    $region2: #{tpu_custom_call.1} parent=1 // loop_pre_header
      _
    $region3: #{tpu_custom_call.1} parent=1 // loop_header
      %s11 = sphi 0, %s15
      %p12 = scmp.ge.s32.totalorder %s11, 4
      %s18 = sphi 0, %s30
      %s19 = sphi 0, %s26
      %s20 = sphi 0, %s18
      %s21 = sphi 0, %s19
      %s22 = sphi 0, %s20
      %s23 = sphi 0, %s21
      %s41 = sphi 0, %s43
      %s44 = sphi 0, %s41
      %s45 = sphi 0, %s44
      %s61 = sphi 0, %s45
      %s67 = sphi 0, %s69
      %s70 = sphi 0, %s67
      %s71 = sphi 0, %s70
      %s87 = sphi 0, %s71
    $region4: #{tpu_custom_call.1} parent=1 // loop_header_branch
      %14 = sbr.rel (%p12) target = $region8
    $region5: #{tpu_custom_call.1} parent=1 // loop_body
      %s16 = ssub.s32 %s11, 1
      %s17 = ssub.s32 %s11, 2
      %s24 = sadd.s32 1, %s19
      %p25 = scmp.ge.s32.totalorder %s24, 2
      %s26 = scalar_select %p25, 0, %s24
      %s27 = sadd.s32 1, %s18
      %s28 = scalar_select %p25, %s27, %s18
      %p29 = scmp.ge.s32.totalorder %s28, 1
      %s30 = scalar_select %p29, 0, %s28
      %s31 = smul.u32 %s18, 2
      %s32 = sadd.s32 %s31, %s19
      %p33 = scmp.lt.s32.totalorder %s32, 1
      %s34 = scalar_select %p33, %s32, 1
      %s35 = smul.u32 %s30, 2
      %s36 = sadd.s32 %s35, %s26
      %p37 = scmp.lt.s32.totalorder %s36, 1
      %s38 = scalar_select %p37, %s36, 1
      %s39 = ssub.s32 %s34, %s38
      %p40 = scmp.eq.s32.totalorder %s39, 0
      %s42 = sadd.s32 %s41, 1
      %s43 = scalar_select %p40, %s41, %s42
      %p46 = pneg %p40
      %p47 = scmp.eq.s32.totalorder %s11, 1
      %p48 = por %p46, %p47
      %p49 = scmp.ne.s32.totalorder %s41, %s44
      %p50 = scmp.eq.s32.totalorder %s11, 0
      %p51 = por %p49, %p50
      %p52 = scmp.ne.s32.totalorder %s41, %s44
      %p53 = scmp.eq.s32.totalorder %s16, 1
      %p54 = por %p52, %p53
      %p55 = scmp.ne.s32.totalorder %s44, %s45
      %p56 = scmp.eq.s32.totalorder %s16, 0
      %p57 = por %p55, %p56
      %p58 = scmp.ne.s32.totalorder %s44, %s45
      %p59 = scmp.eq.s32.totalorder %s17, 1
      %p60 = por %p58, %p59
      %p62 = scmp.ne.s32.totalorder %s45, %s61
      %p63 = scmp.eq.s32.totalorder %s17, 0
      %p64 = por %p62, %p63
      %s65 = ssub.s32 %s18, %s30
      %p66 = scmp.eq.s32.totalorder %s65, 0
      %s68 = sadd.s32 %s67, 1
      %s69 = scalar_select %p66, %s67, %s68
      %p72 = pneg %p66
      %p73 = scmp.eq.s32.totalorder %s11, 1
      %p74 = por %p72, %p73
      %p75 = scmp.ne.s32.totalorder %s67, %s70
      %p76 = scmp.eq.s32.totalorder %s11, 0
      %p77 = por %p75, %p76
      %p78 = scmp.ne.s32.totalorder %s67, %s70
      %p79 = scmp.eq.s32.totalorder %s16, 1
      %p80 = por %p78, %p79
      %p81 = scmp.ne.s32.totalorder %s70, %s71
      %p82 = scmp.eq.s32.totalorder %s16, 0
      %p83 = por %p81, %p82
      %p84 = scmp.ne.s32.totalorder %s70, %s71
      %p85 = scmp.eq.s32.totalorder %s17, 1
      %p86 = por %p84, %p85
      %p88 = scmp.ne.s32.totalorder %s71, %s87
      %p89 = scmp.eq.s32.totalorder %s17, 0
      %p90 = por %p88, %p89
      %p91 = scmp.le.s32.totalorder 1, %s11
      %p92 = scmp.lt.s32.totalorder %s11, 3
      %p93 = pnand %p91, %p92
      %p94 = pneg %p93
      // Predicated region
      $region9: #{tpu_custom_call.1} parent=5 // pred_check
        _
      $region10: #{tpu_custom_call.1} parent=5 // pred_check_branch
        %96 = sbr.rel (%p93) target = $region12
      $region11: #{tpu_custom_call.1} parent=5 // pred_region
        %s97 = ssub.s32 %s11, 1
      $region12: #{tpu_custom_call.1} parent=5 // pred_fallthru
        _
      %p98 = scmp.lt.s32.totalorder %s11, 2
      // Predicated region
      $region13: #{tpu_custom_call.1} parent=5 // pred_check
        %p99 = pneg %p98
      $region14: #{tpu_custom_call.1} parent=5 // pred_check_branch
        %101 = sbr.rel (%p99) target = $region16
      $region15: #{tpu_custom_call.1} parent=5 // pred_region
        // Predicated region
        $region17: #{tpu_custom_call.1} parent=15 // pred_check
          %p102 = pneg %p51
        $region18: #{tpu_custom_call.1} parent=15 // pred_check_branch
          %104 = sbr.rel (%p102) target = $region20
        $region19: #{tpu_custom_call.1} parent=15 // pred_region
          %s105 = sand.u32 %s41, 1
          %s106 = scalar_lea.sflag [#allocation4], %s105
          %s107 = sand.u32 %s41, 1
          %s108 = smul.addr %s107, 512
          %s109 = scalar_lea.vmem [#allocation3], %s108
          %s110 = smul.u32 %s18, 2
          %s111 = sadd.s32 %s110, %s19
          %p112 = scmp.lt.s32.totalorder %s111, 1
          %s113 = scalar_select %p112, %s111, 1
          %s114 = smul.u32 64, %s113
          %s115 = ssub.s32 65, %s114
          %p116 = scmp.lt.s32.totalorder %s115, 64
          %s117 = scalar_select %p116, %s115, 64
          %s118 = smul.u32 128, %s117
          %s120 = ssub.s32 8192, %s118
          %121 = vsyncadd %s106, %s120
          %p122 = scmp.ne.s32.totalorder 0, %s118
          %s123 = smul.addr %s114, 128
          %s124 = scalar_lea.hbm %s0, %s123
          %s125 = smul.u32 8, %s117
          %s126 = sshll.u32 %s109, 4
          %s127 = int_to_ptr.vmem [resolvable:$true] %s126
          %s128 = sshll.u32 %s125, 4
          %132 = dma.hbm_to_vmem [thread:$0]  (%p122), %s124, %s128, %s127, %s106, 128, 128, 8
        $region20: #{tpu_custom_call.1} parent=15 // pred_fallthru
          _
      $region16: #{tpu_custom_call.1} parent=5 // pred_fallthru
        _
      %p133 = scmp.le.s32.totalorder 1, %s11
      %p134 = scmp.lt.s32.totalorder %s11, 3
      %p135 = pnand %p133, %p134
      %p136 = pneg %p135
      // Predicated region
      $region21: #{tpu_custom_call.1} parent=5 // pred_check
        _
      $region22: #{tpu_custom_call.1} parent=5 // pred_check_branch
        %138 = sbr.rel (%p135) target = $region24
      $region23: #{tpu_custom_call.1} parent=5 // pred_region
        %s139 = ssub.s32 %s11, 1
        %s140 = sand.u32 %s44, 1
        %s141 = scalar_lea.sflag [#allocation4], %s140
        %s142 = sand.u32 %s44, 1
        %s143 = smul.addr %s142, 512
        %s144 = scalar_lea.vmem [#allocation3], %s143
        // Predicated region
        $region25: #{tpu_custom_call.1} parent=23 // pred_check
          %p145 = pneg %p57
        $region26: #{tpu_custom_call.1} parent=23 // pred_check_branch
          %147 = sbr.rel (%p145) target = $region28
        $region27: #{tpu_custom_call.1} parent=23 // pred_region
          %148 = dma.done %s141, 8192
        $region28: #{tpu_custom_call.1} parent=23 // pred_fallthru
          _
        %s149 = sand.u32 %s44, 1
        %s150 = scalar_lea.sflag [#allocation4], %s149
        %s151 = sand.u32 %s44, 1
        %s152 = smul.addr %s151, 512
        %s153 = scalar_lea.vmem [#allocation3], %s152
        %p154 = pneg %p57
        %p155 = pneg %p54
        %p156 = pneg %p83
        %p157 = pneg %p80
        %s158 = smul.u32 %s20, 2
        %s159 = sadd.s32 %s158, %s21
        %p160 = scmp.lt.s32.totalorder %s159, 1
        %s161 = scalar_select %p160, %s159, 1
        %s162 = smul.u32 64, %s161
        %s163 = ssub.s32 65, %s162
        %p164 = scmp.lt.s32.totalorder %s163, 64
        %s165 = scalar_select %p164, %s163, 64
        %s166 = smul.u32 128, %s165
        %p167 = scmp.eq.s32.totalorder %s21, 0
        // Predicated region
        $region29: #{tpu_custom_call.1} parent=23 // pred_check
          %p168 = pneg %p167
        $region30: #{tpu_custom_call.1} parent=23 // pred_check_branch
          %170 = sbr.rel (%p168) target = $region32
        $region31: #{tpu_custom_call.1} parent=23 // pred_region
          %171 = vst [vmem:[#allocation2] sm:$0xff] 0.0
          %172 = vst [vmem:[#allocation2 + $0x8] sm:$0xff] 0.0
          %173 = vst [vmem:[#allocation2 + $0x10] sm:$0xff] 0.0
          %174 = vst [vmem:[#allocation2 + $0x18] sm:$0xff] 0.0
          %175 = vst [vmem:[#allocation2 + $0x20] sm:$0xff] 0.0
          %176 = vst [vmem:[#allocation2 + $0x28] sm:$0xff] 0.0
          %177 = vst [vmem:[#allocation2 + $0x30] sm:$0xff] 0.0
          %178 = vst [vmem:[#allocation2 + $0x38] sm:$0xff] 0.0
          %179 = vst [vmem:[#allocation2 + $0x40] sm:$0xff] 0.0
          %180 = vst [vmem:[#allocation2 + $0x48] sm:$0xff] 0.0
          %181 = vst [vmem:[#allocation2 + $0x50] sm:$0xff] 0.0
          %182 = vst [vmem:[#allocation2 + $0x58] sm:$0xff] 0.0
          %183 = vst [vmem:[#allocation2 + $0x60] sm:$0xff] 0.0
          %184 = vst [vmem:[#allocation2 + $0x68] sm:$0xff] 0.0
          %185 = vst [vmem:[#allocation2 + $0x70] sm:$0xff] 0.0
          %186 = vst [vmem:[#allocation2 + $0x78] sm:$0xff] 0.0
          %187 = vst [vmem:[#allocation2 + $0x80] sm:$0xff] 0.0
          %188 = vst [vmem:[#allocation2 + $0x88] sm:$0xff] 0.0
          %189 = vst [vmem:[#allocation2 + $0x90] sm:$0xff] 0.0
          %190 = vst [vmem:[#allocation2 + $0x98] sm:$0xff] 0.0
          %191 = vst [vmem:[#allocation2 + $0xa0] sm:$0xff] 0.0
          %192 = vst [vmem:[#allocation2 + $0xa8] sm:$0xff] 0.0
          %193 = vst [vmem:[#allocation2 + $0xb0] sm:$0xff] 0.0
          %194 = vst [vmem:[#allocation2 + $0xb8] sm:$0xff] 0.0
          %195 = vst [vmem:[#allocation2 + $0xc0] sm:$0xff] 0.0
          %196 = vst [vmem:[#allocation2 + $0xc8] sm:$0xff] 0.0
          %197 = vst [vmem:[#allocation2 + $0xd0] sm:$0xff] 0.0
          %198 = vst [vmem:[#allocation2 + $0xd8] sm:$0xff] 0.0
          %199 = vst [vmem:[#allocation2 + $0xe0] sm:$0xff] 0.0
          %200 = vst [vmem:[#allocation2 + $0xe8] sm:$0xff] 0.0
          %201 = vst [vmem:[#allocation2 + $0xf0] sm:$0xff] 0.0
          %202 = vst [vmem:[#allocation2 + $0xf8] sm:$0xff] 0.0
        $region32: #{tpu_custom_call.1} parent=23 // pred_fallthru
          _
        %s203 = smul.u32 %s20, 2
        %s204 = sadd.s32 %s203, %s21
        %s205 = smul.u32 %s204, 512
        %s206 = sadd.s32 %s205, 512
        %p207 = scmp.gt.s32.totalorder %s206, 520
        %p208 = scmp.le.s32.totalorder %s206, 520
        // Predicated region
        $region33: #{tpu_custom_call.1} parent=23 // pred_check
          %p209 = pneg %p208
        $region34: #{tpu_custom_call.1} parent=23 // pred_check_branch
          %211 = sbr.rel (%p209) target = $region36
        $region35: #{tpu_custom_call.1} parent=23 // pred_region
          %v212 = vld [vmem:[%s144] sm:$0xff]
          %v213 = vld [vmem:[%s144 + $0x8] sm:$0xff]
          %v214 = vld [vmem:[%s144 + $0x10] sm:$0xff]
          %v215 = vld [vmem:[%s144 + $0x18] sm:$0xff]
          %v216 = vld [vmem:[%s144 + $0x20] sm:$0xff]
          %v217 = vld [vmem:[%s144 + $0x28] sm:$0xff]
          %v218 = vld [vmem:[%s144 + $0x30] sm:$0xff]
          %v219 = vld [vmem:[%s144 + $0x38] sm:$0xff]
          %v220 = vld [vmem:[%s144 + $0x40] sm:$0xff]
          %v221 = vld [vmem:[%s144 + $0x48] sm:$0xff]
          %v222 = vld [vmem:[%s144 + $0x50] sm:$0xff]
          %v223 = vld [vmem:[%s144 + $0x58] sm:$0xff]
          %v224 = vld [vmem:[%s144 + $0x60] sm:$0xff]
          %v225 = vld [vmem:[%s144 + $0x68] sm:$0xff]
          %v226 = vld [vmem:[%s144 + $0x70] sm:$0xff]
          %v227 = vld [vmem:[%s144 + $0x78] sm:$0xff]
          %v228 = vld [vmem:[%s144 + $0x80] sm:$0xff]
          %v229 = vld [vmem:[%s144 + $0x88] sm:$0xff]
          %v230 = vld [vmem:[%s144 + $0x90] sm:$0xff]
          %v231 = vld [vmem:[%s144 + $0x98] sm:$0xff]
          %v232 = vld [vmem:[%s144 + $0xa0] sm:$0xff]
          %v233 = vld [vmem:[%s144 + $0xa8] sm:$0xff]
          %v234 = vld [vmem:[%s144 + $0xb0] sm:$0xff]
          %v235 = vld [vmem:[%s144 + $0xb8] sm:$0xff]
          %v236 = vld [vmem:[%s144 + $0xc0] sm:$0xff]
          %v237 = vld [vmem:[%s144 + $0xc8] sm:$0xff]
          %v238 = vld [vmem:[%s144 + $0xd0] sm:$0xff]
          %v239 = vld [vmem:[%s144 + $0xd8] sm:$0xff]
          %v240 = vld [vmem:[%s144 + $0xe0] sm:$0xff]
          %v241 = vld [vmem:[%s144 + $0xe8] sm:$0xff]
          %v242 = vld [vmem:[%s144 + $0xf0] sm:$0xff]
          %v243 = vld [vmem:[%s144 + $0xf8] sm:$0xff]
          %v244 = vld [vmem:[#allocation2] sm:$0xff]
          %v245 = vld [vmem:[#allocation2 + $0x8] sm:$0xff]
          %v246 = vld [vmem:[#allocation2 + $0x10] sm:$0xff]
          %v247 = vld [vmem:[#allocation2 + $0x18] sm:$0xff]
          %v248 = vld [vmem:[#allocation2 + $0x20] sm:$0xff]
          %v249 = vld [vmem:[#allocation2 + $0x28] sm:$0xff]
          %v250 = vld [vmem:[#allocation2 + $0x30] sm:$0xff]
          %v251 = vld [vmem:[#allocation2 + $0x38] sm:$0xff]
          %v252 = vld [vmem:[#allocation2 + $0x40] sm:$0xff]
          %v253 = vld [vmem:[#allocation2 + $0x48] sm:$0xff]
          %v254 = vld [vmem:[#allocation2 + $0x50] sm:$0xff]
          %v255 = vld [vmem:[#allocation2 + $0x58] sm:$0xff]
          %v256 = vld [vmem:[#allocation2 + $0x60] sm:$0xff]
          %v257 = vld [vmem:[#allocation2 + $0x68] sm:$0xff]
          %v258 = vld [vmem:[#allocation2 + $0x70] sm:$0xff]
          %v259 = vld [vmem:[#allocation2 + $0x78] sm:$0xff]
          %v260 = vld [vmem:[#allocation2 + $0x80] sm:$0xff]
          %v261 = vld [vmem:[#allocation2 + $0x88] sm:$0xff]
          %v262 = vld [vmem:[#allocation2 + $0x90] sm:$0xff]
          %v263 = vld [vmem:[#allocation2 + $0x98] sm:$0xff]
          %v264 = vld [vmem:[#allocation2 + $0xa0] sm:$0xff]
          %v265 = vld [vmem:[#allocation2 + $0xa8] sm:$0xff]
          %v266 = vld [vmem:[#allocation2 + $0xb0] sm:$0xff]
          %v267 = vld [vmem:[#allocation2 + $0xb8] sm:$0xff]
          %v268 = vld [vmem:[#allocation2 + $0xc0] sm:$0xff]
          %v269 = vld [vmem:[#allocation2 + $0xc8] sm:$0xff]
          %v270 = vld [vmem:[#allocation2 + $0xd0] sm:$0xff]
          %v271 = vld [vmem:[#allocation2 + $0xd8] sm:$0xff]
          %v272 = vld [vmem:[#allocation2 + $0xe0] sm:$0xff]
          %v273 = vld [vmem:[#allocation2 + $0xe8] sm:$0xff]
          %v274 = vld [vmem:[#allocation2 + $0xf0] sm:$0xff]
          %v275 = vld [vmem:[#allocation2 + $0xf8] sm:$0xff]
          %v276 = vmul.f32 %v212, %v212
          %v277 = vmul.f32 %v213, %v213
          %v278 = vmul.f32 %v214, %v214
          %v279 = vmul.f32 %v215, %v215
          %v280 = vmul.f32 %v216, %v216
          %v281 = vmul.f32 %v217, %v217
          %v282 = vmul.f32 %v218, %v218
          %v283 = vmul.f32 %v219, %v219
          %v284 = vmul.f32 %v220, %v220
          %v285 = vmul.f32 %v221, %v221
          %v286 = vmul.f32 %v222, %v222
          %v287 = vmul.f32 %v223, %v223
          %v288 = vmul.f32 %v224, %v224
          %v289 = vmul.f32 %v225, %v225
          %v290 = vmul.f32 %v226, %v226
          %v291 = vmul.f32 %v227, %v227
          %v292 = vmul.f32 %v228, %v228
          %v293 = vmul.f32 %v229, %v229
          %v294 = vmul.f32 %v230, %v230
          %v295 = vmul.f32 %v231, %v231
          %v296 = vmul.f32 %v232, %v232
          %v297 = vmul.f32 %v233, %v233
          %v298 = vmul.f32 %v234, %v234
          %v299 = vmul.f32 %v235, %v235
          %v300 = vmul.f32 %v236, %v236
          %v301 = vmul.f32 %v237, %v237
          %v302 = vmul.f32 %v238, %v238
          %v303 = vmul.f32 %v239, %v239
          %v304 = vmul.f32 %v240, %v240
          %v305 = vmul.f32 %v241, %v241
          %v306 = vmul.f32 %v242, %v242
          %v307 = vmul.f32 %v243, %v243
          %v308 = vadd.f32 %v244, %v276
          %v309 = vadd.f32 %v245, %v277
          %v310 = vadd.f32 %v246, %v278
          %v311 = vadd.f32 %v247, %v279
          %v312 = vadd.f32 %v248, %v280
          %v313 = vadd.f32 %v249, %v281
          %v314 = vadd.f32 %v250, %v282
          %v315 = vadd.f32 %v251, %v283
          %v316 = vadd.f32 %v252, %v284
          %v317 = vadd.f32 %v253, %v285
          %v318 = vadd.f32 %v254, %v286
          %v319 = vadd.f32 %v255, %v287
          %v320 = vadd.f32 %v256, %v288
          %v321 = vadd.f32 %v257, %v289
          %v322 = vadd.f32 %v258, %v290
          %v323 = vadd.f32 %v259, %v291
          %v324 = vadd.f32 %v260, %v292
          %v325 = vadd.f32 %v261, %v293
          %v326 = vadd.f32 %v262, %v294
          %v327 = vadd.f32 %v263, %v295
          %v328 = vadd.f32 %v264, %v296
          %v329 = vadd.f32 %v265, %v297
          %v330 = vadd.f32 %v266, %v298
          %v331 = vadd.f32 %v267, %v299
          %v332 = vadd.f32 %v268, %v300
          %v333 = vadd.f32 %v269, %v301
          %v334 = vadd.f32 %v270, %v302
          %v335 = vadd.f32 %v271, %v303
          %v336 = vadd.f32 %v272, %v304
          %v337 = vadd.f32 %v273, %v305
          %v338 = vadd.f32 %v274, %v306
          %v339 = vadd.f32 %v275, %v307
          %340 = vst [vmem:[#allocation2] sm:$0xff] %v308
          %341 = vst [vmem:[#allocation2 + $0x8] sm:$0xff] %v309
          %342 = vst [vmem:[#allocation2 + $0x10] sm:$0xff] %v310
          %343 = vst [vmem:[#allocation2 + $0x18] sm:$0xff] %v311
          %344 = vst [vmem:[#allocation2 + $0x20] sm:$0xff] %v312
          %345 = vst [vmem:[#allocation2 + $0x28] sm:$0xff] %v313
          %346 = vst [vmem:[#allocation2 + $0x30] sm:$0xff] %v314
          %347 = vst [vmem:[#allocation2 + $0x38] sm:$0xff] %v315
          %348 = vst [vmem:[#allocation2 + $0x40] sm:$0xff] %v316
          %349 = vst [vmem:[#allocation2 + $0x48] sm:$0xff] %v317
          %350 = vst [vmem:[#allocation2 + $0x50] sm:$0xff] %v318
          %351 = vst [vmem:[#allocation2 + $0x58] sm:$0xff] %v319
          %352 = vst [vmem:[#allocation2 + $0x60] sm:$0xff] %v320
          %353 = vst [vmem:[#allocation2 + $0x68] sm:$0xff] %v321
          %354 = vst [vmem:[#allocation2 + $0x70] sm:$0xff] %v322
          %355 = vst [vmem:[#allocation2 + $0x78] sm:$0xff] %v323
          %356 = vst [vmem:[#allocation2 + $0x80] sm:$0xff] %v324
          %357 = vst [vmem:[#allocation2 + $0x88] sm:$0xff] %v325
          %358 = vst [vmem:[#allocation2 + $0x90] sm:$0xff] %v326
          %359 = vst [vmem:[#allocation2 + $0x98] sm:$0xff] %v327
          %360 = vst [vmem:[#allocation2 + $0xa0] sm:$0xff] %v328
          %361 = vst [vmem:[#allocation2 + $0xa8] sm:$0xff] %v329
          %362 = vst [vmem:[#allocation2 + $0xb0] sm:$0xff] %v330
          %363 = vst [vmem:[#allocation2 + $0xb8] sm:$0xff] %v331
          %364 = vst [vmem:[#allocation2 + $0xc0] sm:$0xff] %v332
          %365 = vst [vmem:[#allocation2 + $0xc8] sm:$0xff] %v333
          %366 = vst [vmem:[#allocation2 + $0xd0] sm:$0xff] %v334
          %367 = vst [vmem:[#allocation2 + $0xd8] sm:$0xff] %v335
          %368 = vst [vmem:[#allocation2 + $0xe0] sm:$0xff] %v336
          %369 = vst [vmem:[#allocation2 + $0xe8] sm:$0xff] %v337
          %370 = vst [vmem:[#allocation2 + $0xf0] sm:$0xff] %v338
          %371 = vst [vmem:[#allocation2 + $0xf8] sm:$0xff] %v339
          %v372 = vld [vmem:[%s144 + $0x100] sm:$0xff]
          %v373 = vld [vmem:[%s144 + $0x108] sm:$0xff]
          %v374 = vld [vmem:[%s144 + $0x110] sm:$0xff]
          %v375 = vld [vmem:[%s144 + $0x118] sm:$0xff]
          %v376 = vld [vmem:[%s144 + $0x120] sm:$0xff]
          %v377 = vld [vmem:[%s144 + $0x128] sm:$0xff]
          %v378 = vld [vmem:[%s144 + $0x130] sm:$0xff]
          %v379 = vld [vmem:[%s144 + $0x138] sm:$0xff]
          %v380 = vld [vmem:[%s144 + $0x140] sm:$0xff]
          %v381 = vld [vmem:[%s144 + $0x148] sm:$0xff]
          %v382 = vld [vmem:[%s144 + $0x150] sm:$0xff]
          %v383 = vld [vmem:[%s144 + $0x158] sm:$0xff]
          %v384 = vld [vmem:[%s144 + $0x160] sm:$0xff]
          %v385 = vld [vmem:[%s144 + $0x168] sm:$0xff]
          %v386 = vld [vmem:[%s144 + $0x170] sm:$0xff]
          %v387 = vld [vmem:[%s144 + $0x178] sm:$0xff]
          %v388 = vld [vmem:[%s144 + $0x180] sm:$0xff]
          %v389 = vld [vmem:[%s144 + $0x188] sm:$0xff]
          %v390 = vld [vmem:[%s144 + $0x190] sm:$0xff]
          %v391 = vld [vmem:[%s144 + $0x198] sm:$0xff]
          %v392 = vld [vmem:[%s144 + $0x1a0] sm:$0xff]
          %v393 = vld [vmem:[%s144 + $0x1a8] sm:$0xff]
          %v394 = vld [vmem:[%s144 + $0x1b0] sm:$0xff]
          %v395 = vld [vmem:[%s144 + $0x1b8] sm:$0xff]
          %v396 = vld [vmem:[%s144 + $0x1c0] sm:$0xff]
          %v397 = vld [vmem:[%s144 + $0x1c8] sm:$0xff]
          %v398 = vld [vmem:[%s144 + $0x1d0] sm:$0xff]
          %v399 = vld [vmem:[%s144 + $0x1d8] sm:$0xff]
          %v400 = vld [vmem:[%s144 + $0x1e0] sm:$0xff]
          %v401 = vld [vmem:[%s144 + $0x1e8] sm:$0xff]
          %v402 = vld [vmem:[%s144 + $0x1f0] sm:$0xff]
          %v403 = vld [vmem:[%s144 + $0x1f8] sm:$0xff]
          %v404 = vld [vmem:[#allocation2] sm:$0xff]
          %v405 = vld [vmem:[#allocation2 + $0x8] sm:$0xff]
          %v406 = vld [vmem:[#allocation2 + $0x10] sm:$0xff]
          %v407 = vld [vmem:[#allocation2 + $0x18] sm:$0xff]
          %v408 = vld [vmem:[#allocation2 + $0x20] sm:$0xff]
          %v409 = vld [vmem:[#allocation2 + $0x28] sm:$0xff]
          %v410 = vld [vmem:[#allocation2 + $0x30] sm:$0xff]
          %v411 = vld [vmem:[#allocation2 + $0x38] sm:$0xff]
          %v412 = vld [vmem:[#allocation2 + $0x40] sm:$0xff]
          %v413 = vld [vmem:[#allocation2 + $0x48] sm:$0xff]
          %v414 = vld [vmem:[#allocation2 + $0x50] sm:$0xff]
          %v415 = vld [vmem:[#allocation2 + $0x58] sm:$0xff]
          %v416 = vld [vmem:[#allocation2 + $0x60] sm:$0xff]
          %v417 = vld [vmem:[#allocation2 + $0x68] sm:$0xff]
          %v418 = vld [vmem:[#allocation2 + $0x70] sm:$0xff]
          %v419 = vld [vmem:[#allocation2 + $0x78] sm:$0xff]
          %v420 = vld [vmem:[#allocation2 + $0x80] sm:$0xff]
          %v421 = vld [vmem:[#allocation2 + $0x88] sm:$0xff]
          %v422 = vld [vmem:[#allocation2 + $0x90] sm:$0xff]
          %v423 = vld [vmem:[#allocation2 + $0x98] sm:$0xff]
          %v424 = vld [vmem:[#allocation2 + $0xa0] sm:$0xff]
          %v425 = vld [vmem:[#allocation2 + $0xa8] sm:$0xff]
          %v426 = vld [vmem:[#allocation2 + $0xb0] sm:$0xff]
          %v427 = vld [vmem:[#allocation2 + $0xb8] sm:$0xff]
          %v428 = vld [vmem:[#allocation2 + $0xc0] sm:$0xff]
          %v429 = vld [vmem:[#allocation2 + $0xc8] sm:$0xff]
          %v430 = vld [vmem:[#allocation2 + $0xd0] sm:$0xff]
          %v431 = vld [vmem:[#allocation2 + $0xd8] sm:$0xff]
          %v432 = vld [vmem:[#allocation2 + $0xe0] sm:$0xff]
          %v433 = vld [vmem:[#allocation2 + $0xe8] sm:$0xff]
          %v434 = vld [vmem:[#allocation2 + $0xf0] sm:$0xff]
          %v435 = vld [vmem:[#allocation2 + $0xf8] sm:$0xff]
          %v436 = vmul.f32 %v372, %v372
          %v437 = vmul.f32 %v373, %v373
          %v438 = vmul.f32 %v374, %v374
          %v439 = vmul.f32 %v375, %v375
          %v440 = vmul.f32 %v376, %v376
          %v441 = vmul.f32 %v377, %v377
          %v442 = vmul.f32 %v378, %v378
          %v443 = vmul.f32 %v379, %v379
          %v444 = vmul.f32 %v380, %v380
          %v445 = vmul.f32 %v381, %v381
          %v446 = vmul.f32 %v382, %v382
          %v447 = vmul.f32 %v383, %v383
          %v448 = vmul.f32 %v384, %v384
          %v449 = vmul.f32 %v385, %v385
          %v450 = vmul.f32 %v386, %v386
          %v451 = vmul.f32 %v387, %v387
          %v452 = vmul.f32 %v388, %v388
          %v453 = vmul.f32 %v389, %v389
          %v454 = vmul.f32 %v390, %v390
          %v455 = vmul.f32 %v391, %v391
          %v456 = vmul.f32 %v392, %v392
          %v457 = vmul.f32 %v393, %v393
          %v458 = vmul.f32 %v394, %v394
          %v459 = vmul.f32 %v395, %v395
          %v460 = vmul.f32 %v396, %v396
          %v461 = vmul.f32 %v397, %v397
          %v462 = vmul.f32 %v398, %v398
          %v463 = vmul.f32 %v399, %v399
          %v464 = vmul.f32 %v400, %v400
          %v465 = vmul.f32 %v401, %v401
          %v466 = vmul.f32 %v402, %v402
          %v467 = vmul.f32 %v403, %v403
          %v468 = vadd.f32 %v404, %v436
          %v469 = vadd.f32 %v405, %v437
          %v470 = vadd.f32 %v406, %v438
          %v471 = vadd.f32 %v407, %v439
          %v472 = vadd.f32 %v408, %v440
          %v473 = vadd.f32 %v409, %v441
          %v474 = vadd.f32 %v410, %v442
          %v475 = vadd.f32 %v411, %v443
          %v476 = vadd.f32 %v412, %v444
          %v477 = vadd.f32 %v413, %v445
          %v478 = vadd.f32 %v414, %v446
          %v479 = vadd.f32 %v415, %v447
          %v480 = vadd.f32 %v416, %v448
          %v481 = vadd.f32 %v417, %v449
          %v482 = vadd.f32 %v418, %v450
          %v483 = vadd.f32 %v419, %v451
          %v484 = vadd.f32 %v420, %v452
          %v485 = vadd.f32 %v421, %v453
          %v486 = vadd.f32 %v422, %v454
          %v487 = vadd.f32 %v423, %v455
          %v488 = vadd.f32 %v424, %v456
          %v489 = vadd.f32 %v425, %v457
          %v490 = vadd.f32 %v426, %v458
          %v491 = vadd.f32 %v427, %v459
          %v492 = vadd.f32 %v428, %v460
          %v493 = vadd.f32 %v429, %v461
          %v494 = vadd.f32 %v430, %v462
          %v495 = vadd.f32 %v431, %v463
          %v496 = vadd.f32 %v432, %v464
          %v497 = vadd.f32 %v433, %v465
          %v498 = vadd.f32 %v434, %v466
          %v499 = vadd.f32 %v435, %v467
          %500 = vst [vmem:[#allocation2] sm:$0xff] %v468
          %501 = vst [vmem:[#allocation2 + $0x8] sm:$0xff] %v469
          %502 = vst [vmem:[#allocation2 + $0x10] sm:$0xff] %v470
          %503 = vst [vmem:[#allocation2 + $0x18] sm:$0xff] %v471
          %504 = vst [vmem:[#allocation2 + $0x20] sm:$0xff] %v472
          %505 = vst [vmem:[#allocation2 + $0x28] sm:$0xff] %v473
          %506 = vst [vmem:[#allocation2 + $0x30] sm:$0xff] %v474
          %507 = vst [vmem:[#allocation2 + $0x38] sm:$0xff] %v475
          %508 = vst [vmem:[#allocation2 + $0x40] sm:$0xff] %v476
          %509 = vst [vmem:[#allocation2 + $0x48] sm:$0xff] %v477
          %510 = vst [vmem:[#allocation2 + $0x50] sm:$0xff] %v478
          %511 = vst [vmem:[#allocation2 + $0x58] sm:$0xff] %v479
          %512 = vst [vmem:[#allocation2 + $0x60] sm:$0xff] %v480
          %513 = vst [vmem:[#allocation2 + $0x68] sm:$0xff] %v481
          %514 = vst [vmem:[#allocation2 + $0x70] sm:$0xff] %v482
          %515 = vst [vmem:[#allocation2 + $0x78] sm:$0xff] %v483
          %516 = vst [vmem:[#allocation2 + $0x80] sm:$0xff] %v484
          %517 = vst [vmem:[#allocation2 + $0x88] sm:$0xff] %v485
          %518 = vst [vmem:[#allocation2 + $0x90] sm:$0xff] %v486
          %519 = vst [vmem:[#allocation2 + $0x98] sm:$0xff] %v487
          %520 = vst [vmem:[#allocation2 + $0xa0] sm:$0xff] %v488
          %521 = vst [vmem:[#allocation2 + $0xa8] sm:$0xff] %v489
          %522 = vst [vmem:[#allocation2 + $0xb0] sm:$0xff] %v490
          %523 = vst [vmem:[#allocation2 + $0xb8] sm:$0xff] %v491
          %524 = vst [vmem:[#allocation2 + $0xc0] sm:$0xff] %v492
          %525 = vst [vmem:[#allocation2 + $0xc8] sm:$0xff] %v493
          %526 = vst [vmem:[#allocation2 + $0xd0] sm:$0xff] %v494
          %527 = vst [vmem:[#allocation2 + $0xd8] sm:$0xff] %v495
          %528 = vst [vmem:[#allocation2 + $0xe0] sm:$0xff] %v496
          %529 = vst [vmem:[#allocation2 + $0xe8] sm:$0xff] %v497
          %530 = vst [vmem:[#allocation2 + $0xf0] sm:$0xff] %v498
          %531 = vst [vmem:[#allocation2 + $0xf8] sm:$0xff] %v499
        $region36: #{tpu_custom_call.1} parent=23 // pred_fallthru
          _
        // Predicated region
        $region37: #{tpu_custom_call.1} parent=23 // pred_check
          %p532 = pneg %p207
        $region38: #{tpu_custom_call.1} parent=23 // pred_check_branch
          %534 = sbr.rel (%p532) target = $region40
        $region39: #{tpu_custom_call.1} parent=23 // pred_region
          %v535 = vld [vmem:[%s144] sm:$0xff]
          %v536 = vld [vmem:[%s144 + $0x8] sm:$0xff]
          %v537 = vld [vmem:[%s144 + $0x10] sm:$0xff]
          %v538 = vld [vmem:[%s144 + $0x18] sm:$0xff]
          %v539 = vld [vmem:[%s144 + $0x20] sm:$0xff]
          %v540 = vld [vmem:[%s144 + $0x28] sm:$0xff]
          %v541 = vld [vmem:[%s144 + $0x30] sm:$0xff]
          %v542 = vld [vmem:[%s144 + $0x38] sm:$0xff]
          %v543 = vld [vmem:[%s144 + $0x40] sm:$0xff]
          %v544 = vld [vmem:[%s144 + $0x48] sm:$0xff]
          %v545 = vld [vmem:[%s144 + $0x50] sm:$0xff]
          %v546 = vld [vmem:[%s144 + $0x58] sm:$0xff]
          %v547 = vld [vmem:[%s144 + $0x60] sm:$0xff]
          %v548 = vld [vmem:[%s144 + $0x68] sm:$0xff]
          %v549 = vld [vmem:[%s144 + $0x70] sm:$0xff]
          %v550 = vld [vmem:[%s144 + $0x78] sm:$0xff]
          %v551 = vld [vmem:[%s144 + $0x80] sm:$0xff]
          %v552 = vld [vmem:[%s144 + $0x88] sm:$0xff]
          %v553 = vld [vmem:[%s144 + $0x90] sm:$0xff]
          %v554 = vld [vmem:[%s144 + $0x98] sm:$0xff]
          %v555 = vld [vmem:[%s144 + $0xa0] sm:$0xff]
          %v556 = vld [vmem:[%s144 + $0xa8] sm:$0xff]
          %v557 = vld [vmem:[%s144 + $0xb0] sm:$0xff]
          %v558 = vld [vmem:[%s144 + $0xb8] sm:$0xff]
          %v559 = vld [vmem:[%s144 + $0xc0] sm:$0xff]
          %v560 = vld [vmem:[%s144 + $0xc8] sm:$0xff]
          %v561 = vld [vmem:[%s144 + $0xd0] sm:$0xff]
          %v562 = vld [vmem:[%s144 + $0xd8] sm:$0xff]
          %v563 = vld [vmem:[%s144 + $0xe0] sm:$0xff]
          %v564 = vld [vmem:[%s144 + $0xe8] sm:$0xff]
          %v565 = vld [vmem:[%s144 + $0xf0] sm:$0xff]
          %v566 = vld [vmem:[%s144 + $0xf8] sm:$0xff]
          %v567 = vlaneseq
          %v568 = vshrl.u32 %v567, 7
          %v569 = vadd.s32 %v568, 8
          %v570 = vadd.s32 %v568, 16
          %v571 = vadd.s32 %v568, 24
          %v572 = vadd.s32 %v568, 32
          %v573 = vadd.s32 %v568, 40
          %v574 = vadd.s32 %v568, 48
          %v575 = vadd.s32 %v568, 56
          %v576 = vadd.s32 %v568, 64
          %v577 = vadd.s32 %v568, 72
          %v578 = vadd.s32 %v568, 80
          %v579 = vadd.s32 %v568, 88
          %v580 = vadd.s32 %v568, 96
          %v581 = vadd.s32 %v568, 104
          %v582 = vadd.s32 %v568, 112
          %v583 = vadd.s32 %v568, 120
          %v584 = vadd.s32 %v568, 128
          %v585 = vadd.s32 %v568, 136
          %v586 = vadd.s32 %v568, 144
          %v587 = vadd.s32 %v568, 152
          %v588 = vadd.s32 %v568, 160
          %v589 = vadd.s32 %v568, 168
          %v590 = vadd.s32 %v568, 176
          %v591 = vadd.s32 %v568, 184
          %v592 = vadd.s32 %v568, 192
          %v593 = vadd.s32 %v568, 200
          %v594 = vadd.s32 %v568, 208
          %v595 = vadd.s32 %v568, 216
          %v596 = vadd.s32 %v568, 224
          %v597 = vadd.s32 %v568, 232
          %v598 = vadd.s32 %v568, 240
          %v599 = vadd.s32 %v568, 248
          %v600 = vstv %s205
          %v601 = vadd.s32 %v600, %v568
          %v602 = vadd.s32 %v600, %v569
          %v603 = vadd.s32 %v600, %v570
          %v604 = vadd.s32 %v600, %v571
          %v605 = vadd.s32 %v600, %v572
          %v606 = vadd.s32 %v600, %v573
          %v607 = vadd.s32 %v600, %v574
          %v608 = vadd.s32 %v600, %v575
          %v609 = vadd.s32 %v600, %v576
          %v610 = vadd.s32 %v600, %v577
          %v611 = vadd.s32 %v600, %v578
          %v612 = vadd.s32 %v600, %v579
          %v613 = vadd.s32 %v600, %v580
          %v614 = vadd.s32 %v600, %v581
          %v615 = vadd.s32 %v600, %v582
          %v616 = vadd.s32 %v600, %v583
          %v617 = vadd.s32 %v600, %v584
          %v618 = vadd.s32 %v600, %v585
          %v619 = vadd.s32 %v600, %v586
          %v620 = vadd.s32 %v600, %v587
          %v621 = vadd.s32 %v600, %v588
          %v622 = vadd.s32 %v600, %v589
          %v623 = vadd.s32 %v600, %v590
          %v624 = vadd.s32 %v600, %v591
          %v625 = vadd.s32 %v600, %v592
          %v626 = vadd.s32 %v600, %v593
          %v627 = vadd.s32 %v600, %v594
          %v628 = vadd.s32 %v600, %v595
          %v629 = vadd.s32 %v600, %v596
          %v630 = vadd.s32 %v600, %v597
          %v631 = vadd.s32 %v600, %v598
          %v632 = vadd.s32 %v600, %v599
          %vm633 = vcmp.lt.s32.totalorder %v601, 520
          %vm634 = vcmp.lt.s32.totalorder %v602, 520
          %vm635 = vcmp.lt.s32.totalorder %v603, 520
          %vm636 = vcmp.lt.s32.totalorder %v604, 520
          %vm637 = vcmp.lt.s32.totalorder %v605, 520
          %vm638 = vcmp.lt.s32.totalorder %v606, 520
          %vm639 = vcmp.lt.s32.totalorder %v607, 520
          %vm640 = vcmp.lt.s32.totalorder %v608, 520
          %vm641 = vcmp.lt.s32.totalorder %v609, 520
          %vm642 = vcmp.lt.s32.totalorder %v610, 520
          %vm643 = vcmp.lt.s32.totalorder %v611, 520
          %vm644 = vcmp.lt.s32.totalorder %v612, 520
          %vm645 = vcmp.lt.s32.totalorder %v613, 520
          %vm646 = vcmp.lt.s32.totalorder %v614, 520
          %vm647 = vcmp.lt.s32.totalorder %v615, 520
          %vm648 = vcmp.lt.s32.totalorder %v616, 520
          %vm649 = vcmp.lt.s32.totalorder %v617, 520
          %vm650 = vcmp.lt.s32.totalorder %v618, 520
          %vm651 = vcmp.lt.s32.totalorder %v619, 520
          %vm652 = vcmp.lt.s32.totalorder %v620, 520
          %vm653 = vcmp.lt.s32.totalorder %v621, 520
          %vm654 = vcmp.lt.s32.totalorder %v622, 520
          %vm655 = vcmp.lt.s32.totalorder %v623, 520
          %vm656 = vcmp.lt.s32.totalorder %v624, 520
          %vm657 = vcmp.lt.s32.totalorder %v625, 520
          %vm658 = vcmp.lt.s32.totalorder %v626, 520
          %vm659 = vcmp.lt.s32.totalorder %v627, 520
          %vm660 = vcmp.lt.s32.totalorder %v628, 520
          %vm661 = vcmp.lt.s32.totalorder %v629, 520
          %vm662 = vcmp.lt.s32.totalorder %v630, 520
          %vm663 = vcmp.lt.s32.totalorder %v631, 520
          %vm664 = vcmp.lt.s32.totalorder %v632, 520
          %v665 = vsel %vm633, %v535, 0.0
          %v666 = vsel %vm634, %v536, 0.0
          %v667 = vsel %vm635, %v537, 0.0
          %v668 = vsel %vm636, %v538, 0.0
          %v669 = vsel %vm637, %v539, 0.0
          %v670 = vsel %vm638, %v540, 0.0
          %v671 = vsel %vm639, %v541, 0.0
          %v672 = vsel %vm640, %v542, 0.0
          %v673 = vsel %vm641, %v543, 0.0
          %v674 = vsel %vm642, %v544, 0.0
          %v675 = vsel %vm643, %v545, 0.0
          %v676 = vsel %vm644, %v546, 0.0
          %v677 = vsel %vm645, %v547, 0.0
          %v678 = vsel %vm646, %v548, 0.0
          %v679 = vsel %vm647, %v549, 0.0
          %v680 = vsel %vm648, %v550, 0.0
          %v681 = vsel %vm649, %v551, 0.0
          %v682 = vsel %vm650, %v552, 0.0
          %v683 = vsel %vm651, %v553, 0.0
          %v684 = vsel %vm652, %v554, 0.0
          %v685 = vsel %vm653, %v555, 0.0
          %v686 = vsel %vm654, %v556, 0.0
          %v687 = vsel %vm655, %v557, 0.0
          %v688 = vsel %vm656, %v558, 0.0
          %v689 = vsel %vm657, %v559, 0.0
          %v690 = vsel %vm658, %v560, 0.0
          %v691 = vsel %vm659, %v561, 0.0
          %v692 = vsel %vm660, %v562, 0.0
          %v693 = vsel %vm661, %v563, 0.0
          %v694 = vsel %vm662, %v564, 0.0
          %v695 = vsel %vm663, %v565, 0.0
          %v696 = vsel %vm664, %v566, 0.0
          %v697 = vld [vmem:[#allocation2] sm:$0xff]
          %v698 = vld [vmem:[#allocation2 + $0x8] sm:$0xff]
          %v699 = vld [vmem:[#allocation2 + $0x10] sm:$0xff]
          %v700 = vld [vmem:[#allocation2 + $0x18] sm:$0xff]
          %v701 = vld [vmem:[#allocation2 + $0x20] sm:$0xff]
          %v702 = vld [vmem:[#allocation2 + $0x28] sm:$0xff]
          %v703 = vld [vmem:[#allocation2 + $0x30] sm:$0xff]
          %v704 = vld [vmem:[#allocation2 + $0x38] sm:$0xff]
          %v705 = vld [vmem:[#allocation2 + $0x40] sm:$0xff]
          %v706 = vld [vmem:[#allocation2 + $0x48] sm:$0xff]
          %v707 = vld [vmem:[#allocation2 + $0x50] sm:$0xff]
          %v708 = vld [vmem:[#allocation2 + $0x58] sm:$0xff]
          %v709 = vld [vmem:[#allocation2 + $0x60] sm:$0xff]
          %v710 = vld [vmem:[#allocation2 + $0x68] sm:$0xff]
          %v711 = vld [vmem:[#allocation2 + $0x70] sm:$0xff]
          %v712 = vld [vmem:[#allocation2 + $0x78] sm:$0xff]
          %v713 = vld [vmem:[#allocation2 + $0x80] sm:$0xff]
          %v714 = vld [vmem:[#allocation2 + $0x88] sm:$0xff]
          %v715 = vld [vmem:[#allocation2 + $0x90] sm:$0xff]
          %v716 = vld [vmem:[#allocation2 + $0x98] sm:$0xff]
          %v717 = vld [vmem:[#allocation2 + $0xa0] sm:$0xff]
          %v718 = vld [vmem:[#allocation2 + $0xa8] sm:$0xff]
          %v719 = vld [vmem:[#allocation2 + $0xb0] sm:$0xff]
          %v720 = vld [vmem:[#allocation2 + $0xb8] sm:$0xff]
          %v721 = vld [vmem:[#allocation2 + $0xc0] sm:$0xff]
          %v722 = vld [vmem:[#allocation2 + $0xc8] sm:$0xff]
          %v723 = vld [vmem:[#allocation2 + $0xd0] sm:$0xff]
          %v724 = vld [vmem:[#allocation2 + $0xd8] sm:$0xff]
          %v725 = vld [vmem:[#allocation2 + $0xe0] sm:$0xff]
          %v726 = vld [vmem:[#allocation2 + $0xe8] sm:$0xff]
          %v727 = vld [vmem:[#allocation2 + $0xf0] sm:$0xff]
          %v728 = vld [vmem:[#allocation2 + $0xf8] sm:$0xff]
          %v729 = vmul.f32 %v665, %v665
          %v730 = vmul.f32 %v666, %v666
          %v731 = vmul.f32 %v667, %v667
          %v732 = vmul.f32 %v668, %v668
          %v733 = vmul.f32 %v669, %v669
          %v734 = vmul.f32 %v670, %v670
          %v735 = vmul.f32 %v671, %v671
          %v736 = vmul.f32 %v672, %v672
          %v737 = vmul.f32 %v673, %v673
          %v738 = vmul.f32 %v674, %v674
          %v739 = vmul.f32 %v675, %v675
          %v740 = vmul.f32 %v676, %v676
          %v741 = vmul.f32 %v677, %v677
          %v742 = vmul.f32 %v678, %v678
          %v743 = vmul.f32 %v679, %v679
          %v744 = vmul.f32 %v680, %v680
          %v745 = vmul.f32 %v681, %v681
          %v746 = vmul.f32 %v682, %v682
          %v747 = vmul.f32 %v683, %v683
          %v748 = vmul.f32 %v684, %v684
          %v749 = vmul.f32 %v685, %v685
          %v750 = vmul.f32 %v686, %v686
          %v751 = vmul.f32 %v687, %v687
          %v752 = vmul.f32 %v688, %v688
          %v753 = vmul.f32 %v689, %v689
          %v754 = vmul.f32 %v690, %v690
          %v755 = vmul.f32 %v691, %v691
          %v756 = vmul.f32 %v692, %v692
          %v757 = vmul.f32 %v693, %v693
          %v758 = vmul.f32 %v694, %v694
          %v759 = vmul.f32 %v695, %v695
          %v760 = vmul.f32 %v696, %v696
          %v761 = vadd.f32 %v697, %v729
          %v762 = vadd.f32 %v698, %v730
          %v763 = vadd.f32 %v699, %v731
          %v764 = vadd.f32 %v700, %v732
          %v765 = vadd.f32 %v701, %v733
          %v766 = vadd.f32 %v702, %v734
          %v767 = vadd.f32 %v703, %v735
          %v768 = vadd.f32 %v704, %v736
          %v769 = vadd.f32 %v705, %v737
          %v770 = vadd.f32 %v706, %v738
          %v771 = vadd.f32 %v707, %v739
          %v772 = vadd.f32 %v708, %v740
          %v773 = vadd.f32 %v709, %v741
          %v774 = vadd.f32 %v710, %v742
          %v775 = vadd.f32 %v711, %v743
          %v776 = vadd.f32 %v712, %v744
          %v777 = vadd.f32 %v713, %v745
          %v778 = vadd.f32 %v714, %v746
          %v779 = vadd.f32 %v715, %v747
          %v780 = vadd.f32 %v716, %v748
          %v781 = vadd.f32 %v717, %v749
          %v782 = vadd.f32 %v718, %v750
          %v783 = vadd.f32 %v719, %v751
          %v784 = vadd.f32 %v720, %v752
          %v785 = vadd.f32 %v721, %v753
          %v786 = vadd.f32 %v722, %v754
          %v787 = vadd.f32 %v723, %v755
          %v788 = vadd.f32 %v724, %v756
          %v789 = vadd.f32 %v725, %v757
          %v790 = vadd.f32 %v726, %v758
          %v791 = vadd.f32 %v727, %v759
          %v792 = vadd.f32 %v728, %v760
          %793 = vst [vmem:[#allocation2] sm:$0xff] %v761
          %794 = vst [vmem:[#allocation2 + $0x8] sm:$0xff] %v762
          %795 = vst [vmem:[#allocation2 + $0x10] sm:$0xff] %v763
          %796 = vst [vmem:[#allocation2 + $0x18] sm:$0xff] %v764
          %797 = vst [vmem:[#allocation2 + $0x20] sm:$0xff] %v765
          %798 = vst [vmem:[#allocation2 + $0x28] sm:$0xff] %v766
          %799 = vst [vmem:[#allocation2 + $0x30] sm:$0xff] %v767
          %800 = vst [vmem:[#allocation2 + $0x38] sm:$0xff] %v768
          %801 = vst [vmem:[#allocation2 + $0x40] sm:$0xff] %v769
          %802 = vst [vmem:[#allocation2 + $0x48] sm:$0xff] %v770
          %803 = vst [vmem:[#allocation2 + $0x50] sm:$0xff] %v771
          %804 = vst [vmem:[#allocation2 + $0x58] sm:$0xff] %v772
          %805 = vst [vmem:[#allocation2 + $0x60] sm:$0xff] %v773
          %806 = vst [vmem:[#allocation2 + $0x68] sm:$0xff] %v774
          %807 = vst [vmem:[#allocation2 + $0x70] sm:$0xff] %v775
          %808 = vst [vmem:[#allocation2 + $0x78] sm:$0xff] %v776
          %809 = vst [vmem:[#allocation2 + $0x80] sm:$0xff] %v777
          %810 = vst [vmem:[#allocation2 + $0x88] sm:$0xff] %v778
          %811 = vst [vmem:[#allocation2 + $0x90] sm:$0xff] %v779
          %812 = vst [vmem:[#allocation2 + $0x98] sm:$0xff] %v780
          %813 = vst [vmem:[#allocation2 + $0xa0] sm:$0xff] %v781
          %814 = vst [vmem:[#allocation2 + $0xa8] sm:$0xff] %v782
          %815 = vst [vmem:[#allocation2 + $0xb0] sm:$0xff] %v783
          %816 = vst [vmem:[#allocation2 + $0xb8] sm:$0xff] %v784
          %817 = vst [vmem:[#allocation2 + $0xc0] sm:$0xff] %v785
          %818 = vst [vmem:[#allocation2 + $0xc8] sm:$0xff] %v786
          %819 = vst [vmem:[#allocation2 + $0xd0] sm:$0xff] %v787
          %820 = vst [vmem:[#allocation2 + $0xd8] sm:$0xff] %v788
          %821 = vst [vmem:[#allocation2 + $0xe0] sm:$0xff] %v789
          %822 = vst [vmem:[#allocation2 + $0xe8] sm:$0xff] %v790
          %823 = vst [vmem:[#allocation2 + $0xf0] sm:$0xff] %v791
          %824 = vst [vmem:[#allocation2 + $0xf8] sm:$0xff] %v792
          %v825 = vld [vmem:[%s144 + $0x100] sm:$0xff]
          %v826 = vld [vmem:[%s144 + $0x108] sm:$0xff]
          %v827 = vld [vmem:[%s144 + $0x110] sm:$0xff]
          %v828 = vld [vmem:[%s144 + $0x118] sm:$0xff]
          %v829 = vld [vmem:[%s144 + $0x120] sm:$0xff]
          %v830 = vld [vmem:[%s144 + $0x128] sm:$0xff]
          %v831 = vld [vmem:[%s144 + $0x130] sm:$0xff]
          %v832 = vld [vmem:[%s144 + $0x138] sm:$0xff]
          %v833 = vld [vmem:[%s144 + $0x140] sm:$0xff]
          %v834 = vld [vmem:[%s144 + $0x148] sm:$0xff]
          %v835 = vld [vmem:[%s144 + $0x150] sm:$0xff]
          %v836 = vld [vmem:[%s144 + $0x158] sm:$0xff]
          %v837 = vld [vmem:[%s144 + $0x160] sm:$0xff]
          %v838 = vld [vmem:[%s144 + $0x168] sm:$0xff]
          %v839 = vld [vmem:[%s144 + $0x170] sm:$0xff]
          %v840 = vld [vmem:[%s144 + $0x178] sm:$0xff]
          %v841 = vld [vmem:[%s144 + $0x180] sm:$0xff]
          %v842 = vld [vmem:[%s144 + $0x188] sm:$0xff]
          %v843 = vld [vmem:[%s144 + $0x190] sm:$0xff]
          %v844 = vld [vmem:[%s144 + $0x198] sm:$0xff]
          %v845 = vld [vmem:[%s144 + $0x1a0] sm:$0xff]
          %v846 = vld [vmem:[%s144 + $0x1a8] sm:$0xff]
          %v847 = vld [vmem:[%s144 + $0x1b0] sm:$0xff]
          %v848 = vld [vmem:[%s144 + $0x1b8] sm:$0xff]
          %v849 = vld [vmem:[%s144 + $0x1c0] sm:$0xff]
          %v850 = vld [vmem:[%s144 + $0x1c8] sm:$0xff]
          %v851 = vld [vmem:[%s144 + $0x1d0] sm:$0xff]
          %v852 = vld [vmem:[%s144 + $0x1d8] sm:$0xff]
          %v853 = vld [vmem:[%s144 + $0x1e0] sm:$0xff]
          %v854 = vld [vmem:[%s144 + $0x1e8] sm:$0xff]
          %v855 = vld [vmem:[%s144 + $0x1f0] sm:$0xff]
          %v856 = vld [vmem:[%s144 + $0x1f8] sm:$0xff]
          %s857 = sadd.s32 %s205, 256
          %v858 = vstv %s857
          %v859 = vadd.s32 %v858, %v568
          %v860 = vadd.s32 %v858, %v569
          %v861 = vadd.s32 %v858, %v570
          %v862 = vadd.s32 %v858, %v571
          %v863 = vadd.s32 %v858, %v572
          %v864 = vadd.s32 %v858, %v573
          %v865 = vadd.s32 %v858, %v574
          %v866 = vadd.s32 %v858, %v575
          %v867 = vadd.s32 %v858, %v576
          %v868 = vadd.s32 %v858, %v577
          %v869 = vadd.s32 %v858, %v578
          %v870 = vadd.s32 %v858, %v579
          %v871 = vadd.s32 %v858, %v580
          %v872 = vadd.s32 %v858, %v581
          %v873 = vadd.s32 %v858, %v582
          %v874 = vadd.s32 %v858, %v583
          %v875 = vadd.s32 %v858, %v584
          %v876 = vadd.s32 %v858, %v585
          %v877 = vadd.s32 %v858, %v586
          %v878 = vadd.s32 %v858, %v587
          %v879 = vadd.s32 %v858, %v588
          %v880 = vadd.s32 %v858, %v589
          %v881 = vadd.s32 %v858, %v590
          %v882 = vadd.s32 %v858, %v591
          %v883 = vadd.s32 %v858, %v592
          %v884 = vadd.s32 %v858, %v593
          %v885 = vadd.s32 %v858, %v594
          %v886 = vadd.s32 %v858, %v595
          %v887 = vadd.s32 %v858, %v596
          %v888 = vadd.s32 %v858, %v597
          %v889 = vadd.s32 %v858, %v598
          %v890 = vadd.s32 %v858, %v599
          %vm891 = vcmp.lt.s32.totalorder %v859, 520
          %vm892 = vcmp.lt.s32.totalorder %v860, 520
          %vm893 = vcmp.lt.s32.totalorder %v861, 520
          %vm894 = vcmp.lt.s32.totalorder %v862, 520
          %vm895 = vcmp.lt.s32.totalorder %v863, 520
          %vm896 = vcmp.lt.s32.totalorder %v864, 520
          %vm897 = vcmp.lt.s32.totalorder %v865, 520
          %vm898 = vcmp.lt.s32.totalorder %v866, 520
          %vm899 = vcmp.lt.s32.totalorder %v867, 520
          %vm900 = vcmp.lt.s32.totalorder %v868, 520
          %vm901 = vcmp.lt.s32.totalorder %v869, 520
          %vm902 = vcmp.lt.s32.totalorder %v870, 520
          %vm903 = vcmp.lt.s32.totalorder %v871, 520
          %vm904 = vcmp.lt.s32.totalorder %v872, 520
          %vm905 = vcmp.lt.s32.totalorder %v873, 520
          %vm906 = vcmp.lt.s32.totalorder %v874, 520
          %vm907 = vcmp.lt.s32.totalorder %v875, 520
          %vm908 = vcmp.lt.s32.totalorder %v876, 520
          %vm909 = vcmp.lt.s32.totalorder %v877, 520
          %vm910 = vcmp.lt.s32.totalorder %v878, 520
          %vm911 = vcmp.lt.s32.totalorder %v879, 520
          %vm912 = vcmp.lt.s32.totalorder %v880, 520
          %vm913 = vcmp.lt.s32.totalorder %v881, 520
          %vm914 = vcmp.lt.s32.totalorder %v882, 520
          %vm915 = vcmp.lt.s32.totalorder %v883, 520
          %vm916 = vcmp.lt.s32.totalorder %v884, 520
          %vm917 = vcmp.lt.s32.totalorder %v885, 520
          %vm918 = vcmp.lt.s32.totalorder %v886, 520
          %vm919 = vcmp.lt.s32.totalorder %v887, 520
          %vm920 = vcmp.lt.s32.totalorder %v888, 520
          %vm921 = vcmp.lt.s32.totalorder %v889, 520
          %vm922 = vcmp.lt.s32.totalorder %v890, 520
          %v923 = vsel %vm891, %v825, 0.0
          %v924 = vsel %vm892, %v826, 0.0
          %v925 = vsel %vm893, %v827, 0.0
          %v926 = vsel %vm894, %v828, 0.0
          %v927 = vsel %vm895, %v829, 0.0
          %v928 = vsel %vm896, %v830, 0.0
          %v929 = vsel %vm897, %v831, 0.0
          %v930 = vsel %vm898, %v832, 0.0
          %v931 = vsel %vm899, %v833, 0.0
          %v932 = vsel %vm900, %v834, 0.0
          %v933 = vsel %vm901, %v835, 0.0
          %v934 = vsel %vm902, %v836, 0.0
          %v935 = vsel %vm903, %v837, 0.0
          %v936 = vsel %vm904, %v838, 0.0
          %v937 = vsel %vm905, %v839, 0.0
          %v938 = vsel %vm906, %v840, 0.0
          %v939 = vsel %vm907, %v841, 0.0
          %v940 = vsel %vm908, %v842, 0.0
          %v941 = vsel %vm909, %v843, 0.0
          %v942 = vsel %vm910, %v844, 0.0
          %v943 = vsel %vm911, %v845, 0.0
          %v944 = vsel %vm912, %v846, 0.0
          %v945 = vsel %vm913, %v847, 0.0
          %v946 = vsel %vm914, %v848, 0.0
          %v947 = vsel %vm915, %v849, 0.0
          %v948 = vsel %vm916, %v850, 0.0
          %v949 = vsel %vm917, %v851, 0.0
          %v950 = vsel %vm918, %v852, 0.0
          %v951 = vsel %vm919, %v853, 0.0
          %v952 = vsel %vm920, %v854, 0.0
          %v953 = vsel %vm921, %v855, 0.0
          %v954 = vsel %vm922, %v856, 0.0
          %v955 = vld [vmem:[#allocation2] sm:$0xff]
          %v956 = vld [vmem:[#allocation2 + $0x8] sm:$0xff]
          %v957 = vld [vmem:[#allocation2 + $0x10] sm:$0xff]
          %v958 = vld [vmem:[#allocation2 + $0x18] sm:$0xff]
          %v959 = vld [vmem:[#allocation2 + $0x20] sm:$0xff]
          %v960 = vld [vmem:[#allocation2 + $0x28] sm:$0xff]
          %v961 = vld [vmem:[#allocation2 + $0x30] sm:$0xff]
          %v962 = vld [vmem:[#allocation2 + $0x38] sm:$0xff]
          %v963 = vld [vmem:[#allocation2 + $0x40] sm:$0xff]
          %v964 = vld [vmem:[#allocation2 + $0x48] sm:$0xff]
          %v965 = vld [vmem:[#allocation2 + $0x50] sm:$0xff]
          %v966 = vld [vmem:[#allocation2 + $0x58] sm:$0xff]
          %v967 = vld [vmem:[#allocation2 + $0x60] sm:$0xff]
          %v968 = vld [vmem:[#allocation2 + $0x68] sm:$0xff]
          %v969 = vld [vmem:[#allocation2 + $0x70] sm:$0xff]
          %v970 = vld [vmem:[#allocation2 + $0x78] sm:$0xff]
          %v971 = vld [vmem:[#allocation2 + $0x80] sm:$0xff]
          %v972 = vld [vmem:[#allocation2 + $0x88] sm:$0xff]
          %v973 = vld [vmem:[#allocation2 + $0x90] sm:$0xff]
          %v974 = vld [vmem:[#allocation2 + $0x98] sm:$0xff]
          %v975 = vld [vmem:[#allocation2 + $0xa0] sm:$0xff]
          %v976 = vld [vmem:[#allocation2 + $0xa8] sm:$0xff]
          %v977 = vld [vmem:[#allocation2 + $0xb0] sm:$0xff]
          %v978 = vld [vmem:[#allocation2 + $0xb8] sm:$0xff]
          %v979 = vld [vmem:[#allocation2 + $0xc0] sm:$0xff]
          %v980 = vld [vmem:[#allocation2 + $0xc8] sm:$0xff]
          %v981 = vld [vmem:[#allocation2 + $0xd0] sm:$0xff]
          %v982 = vld [vmem:[#allocation2 + $0xd8] sm:$0xff]
          %v983 = vld [vmem:[#allocation2 + $0xe0] sm:$0xff]
          %v984 = vld [vmem:[#allocation2 + $0xe8] sm:$0xff]
          %v985 = vld [vmem:[#allocation2 + $0xf0] sm:$0xff]
          %v986 = vld [vmem:[#allocation2 + $0xf8] sm:$0xff]
          %v987 = vmul.f32 %v923, %v923
          %v988 = vmul.f32 %v924, %v924
          %v989 = vmul.f32 %v925, %v925
          %v990 = vmul.f32 %v926, %v926
          %v991 = vmul.f32 %v927, %v927
          %v992 = vmul.f32 %v928, %v928
          %v993 = vmul.f32 %v929, %v929
          %v994 = vmul.f32 %v930, %v930
          %v995 = vmul.f32 %v931, %v931
          %v996 = vmul.f32 %v932, %v932
          %v997 = vmul.f32 %v933, %v933
          %v998 = vmul.f32 %v934, %v934
          %v999 = vmul.f32 %v935, %v935
          %v1000 = vmul.f32 %v936, %v936
          %v1001 = vmul.f32 %v937, %v937
          %v1002 = vmul.f32 %v938, %v938
          %v1003 = vmul.f32 %v939, %v939
          %v1004 = vmul.f32 %v940, %v940
          %v1005 = vmul.f32 %v941, %v941
          %v1006 = vmul.f32 %v942, %v942
          %v1007 = vmul.f32 %v943, %v943
          %v1008 = vmul.f32 %v944, %v944
          %v1009 = vmul.f32 %v945, %v945
          %v1010 = vmul.f32 %v946, %v946
          %v1011 = vmul.f32 %v947, %v947
          %v1012 = vmul.f32 %v948, %v948
          %v1013 = vmul.f32 %v949, %v949
          %v1014 = vmul.f32 %v950, %v950
          %v1015 = vmul.f32 %v951, %v951
          %v1016 = vmul.f32 %v952, %v952
          %v1017 = vmul.f32 %v953, %v953
          %v1018 = vmul.f32 %v954, %v954
          %v1019 = vadd.f32 %v955, %v987
          %v1020 = vadd.f32 %v956, %v988
          %v1021 = vadd.f32 %v957, %v989
          %v1022 = vadd.f32 %v958, %v990
          %v1023 = vadd.f32 %v959, %v991
          %v1024 = vadd.f32 %v960, %v992
          %v1025 = vadd.f32 %v961, %v993
          %v1026 = vadd.f32 %v962, %v994
          %v1027 = vadd.f32 %v963, %v995
          %v1028 = vadd.f32 %v964, %v996
          %v1029 = vadd.f32 %v965, %v997
          %v1030 = vadd.f32 %v966, %v998
          %v1031 = vadd.f32 %v967, %v999
          %v1032 = vadd.f32 %v968, %v1000
          %v1033 = vadd.f32 %v969, %v1001
          %v1034 = vadd.f32 %v970, %v1002
          %v1035 = vadd.f32 %v971, %v1003
          %v1036 = vadd.f32 %v972, %v1004
          %v1037 = vadd.f32 %v973, %v1005
          %v1038 = vadd.f32 %v974, %v1006
          %v1039 = vadd.f32 %v975, %v1007
          %v1040 = vadd.f32 %v976, %v1008
          %v1041 = vadd.f32 %v977, %v1009
          %v1042 = vadd.f32 %v978, %v1010
          %v1043 = vadd.f32 %v979, %v1011
          %v1044 = vadd.f32 %v980, %v1012
          %v1045 = vadd.f32 %v981, %v1013
          %v1046 = vadd.f32 %v982, %v1014
          %v1047 = vadd.f32 %v983, %v1015
          %v1048 = vadd.f32 %v984, %v1016
          %v1049 = vadd.f32 %v985, %v1017
          %v1050 = vadd.f32 %v986, %v1018
          %1051 = vst [vmem:[#allocation2] sm:$0xff] %v1019
          %1052 = vst [vmem:[#allocation2 + $0x8] sm:$0xff] %v1020
          %1053 = vst [vmem:[#allocation2 + $0x10] sm:$0xff] %v1021
          %1054 = vst [vmem:[#allocation2 + $0x18] sm:$0xff] %v1022
          %1055 = vst [vmem:[#allocation2 + $0x20] sm:$0xff] %v1023
          %1056 = vst [vmem:[#allocation2 + $0x28] sm:$0xff] %v1024
          %1057 = vst [vmem:[#allocation2 + $0x30] sm:$0xff] %v1025
          %1058 = vst [vmem:[#allocation2 + $0x38] sm:$0xff] %v1026
          %1059 = vst [vmem:[#allocation2 + $0x40] sm:$0xff] %v1027
          %1060 = vst [vmem:[#allocation2 + $0x48] sm:$0xff] %v1028
          %1061 = vst [vmem:[#allocation2 + $0x50] sm:$0xff] %v1029
          %1062 = vst [vmem:[#allocation2 + $0x58] sm:$0xff] %v1030
          %1063 = vst [vmem:[#allocation2 + $0x60] sm:$0xff] %v1031
          %1064 = vst [vmem:[#allocation2 + $0x68] sm:$0xff] %v1032
          %1065 = vst [vmem:[#allocation2 + $0x70] sm:$0xff] %v1033
          %1066 = vst [vmem:[#allocation2 + $0x78] sm:$0xff] %v1034
          %1067 = vst [vmem:[#allocation2 + $0x80] sm:$0xff] %v1035
          %1068 = vst [vmem:[#allocation2 + $0x88] sm:$0xff] %v1036
          %1069 = vst [vmem:[#allocation2 + $0x90] sm:$0xff] %v1037
          %1070 = vst [vmem:[#allocation2 + $0x98] sm:$0xff] %v1038
          %1071 = vst [vmem:[#allocation2 + $0xa0] sm:$0xff] %v1039
          %1072 = vst [vmem:[#allocation2 + $0xa8] sm:$0xff] %v1040
          %1073 = vst [vmem:[#allocation2 + $0xb0] sm:$0xff] %v1041
          %1074 = vst [vmem:[#allocation2 + $0xb8] sm:$0xff] %v1042
          %1075 = vst [vmem:[#allocation2 + $0xc0] sm:$0xff] %v1043
          %1076 = vst [vmem:[#allocation2 + $0xc8] sm:$0xff] %v1044
          %1077 = vst [vmem:[#allocation2 + $0xd0] sm:$0xff] %v1045
          %1078 = vst [vmem:[#allocation2 + $0xd8] sm:$0xff] %v1046
          %1079 = vst [vmem:[#allocation2 + $0xe0] sm:$0xff] %v1047
          %1080 = vst [vmem:[#allocation2 + $0xe8] sm:$0xff] %v1048
          %1081 = vst [vmem:[#allocation2 + $0xf0] sm:$0xff] %v1049
          %1082 = vst [vmem:[#allocation2 + $0xf8] sm:$0xff] %v1050
        $region40: #{tpu_custom_call.1} parent=23 // pred_fallthru
          _
        %p1083 = scmp.eq.s32.totalorder %s21, 1
        // Predicated region
        $region41: #{tpu_custom_call.1} parent=23 // pred_check
          %p1084 = pneg %p1083
        $region42: #{tpu_custom_call.1} parent=23 // pred_check_branch
          %1086 = sbr.rel (%p1084) target = $region44
        $region43: #{tpu_custom_call.1} parent=23 // pred_region
          %v1087 = vld [vmem:[#allocation2] sm:$0xff]
          %v1088 = vld [vmem:[#allocation2 + $0x8] sm:$0xff]
          %v1089 = vld [vmem:[#allocation2 + $0x10] sm:$0xff]
          %v1090 = vld [vmem:[#allocation2 + $0x18] sm:$0xff]
          %v1091 = vld [vmem:[#allocation2 + $0x20] sm:$0xff]
          %v1092 = vld [vmem:[#allocation2 + $0x28] sm:$0xff]
          %v1093 = vld [vmem:[#allocation2 + $0x30] sm:$0xff]
          %v1094 = vld [vmem:[#allocation2 + $0x38] sm:$0xff]
          %v1095 = vld [vmem:[#allocation2 + $0x40] sm:$0xff]
          %v1096 = vld [vmem:[#allocation2 + $0x48] sm:$0xff]
          %v1097 = vld [vmem:[#allocation2 + $0x50] sm:$0xff]
          %v1098 = vld [vmem:[#allocation2 + $0x58] sm:$0xff]
          %v1099 = vld [vmem:[#allocation2 + $0x60] sm:$0xff]
          %v1100 = vld [vmem:[#allocation2 + $0x68] sm:$0xff]
          %v1101 = vld [vmem:[#allocation2 + $0x70] sm:$0xff]
          %v1102 = vld [vmem:[#allocation2 + $0x78] sm:$0xff]
          %v1103 = vld [vmem:[#allocation2 + $0x80] sm:$0xff]
          %v1104 = vld [vmem:[#allocation2 + $0x88] sm:$0xff]
          %v1105 = vld [vmem:[#allocation2 + $0x90] sm:$0xff]
          %v1106 = vld [vmem:[#allocation2 + $0x98] sm:$0xff]
          %v1107 = vld [vmem:[#allocation2 + $0xa0] sm:$0xff]
          %v1108 = vld [vmem:[#allocation2 + $0xa8] sm:$0xff]
          %v1109 = vld [vmem:[#allocation2 + $0xb0] sm:$0xff]
          %v1110 = vld [vmem:[#allocation2 + $0xb8] sm:$0xff]
          %v1111 = vld [vmem:[#allocation2 + $0xc0] sm:$0xff]
          %v1112 = vld [vmem:[#allocation2 + $0xc8] sm:$0xff]
          %v1113 = vld [vmem:[#allocation2 + $0xd0] sm:$0xff]
          %v1114 = vld [vmem:[#allocation2 + $0xd8] sm:$0xff]
          %v1115 = vld [vmem:[#allocation2 + $0xe0] sm:$0xff]
          %v1116 = vld [vmem:[#allocation2 + $0xe8] sm:$0xff]
          %v1117 = vld [vmem:[#allocation2 + $0xf0] sm:$0xff]
          %v1118 = vld [vmem:[#allocation2 + $0xf8] sm:$0xff]
          %v1119 = vadd.f32 %v1087, %v1088
          %v1120 = vadd.f32 %v1119, %v1089
          %v1121 = vadd.f32 %v1120, %v1090
          %v1122 = vadd.f32 %v1121, %v1091
          %v1123 = vadd.f32 %v1122, %v1092
          %v1124 = vadd.f32 %v1123, %v1093
          %v1125 = vadd.f32 %v1124, %v1094
          %v1126 = vadd.f32 %v1125, %v1095
          %v1127 = vadd.f32 %v1126, %v1096
          %v1128 = vadd.f32 %v1127, %v1097
          %v1129 = vadd.f32 %v1128, %v1098
          %v1130 = vadd.f32 %v1129, %v1099
          %v1131 = vadd.f32 %v1130, %v1100
          %v1132 = vadd.f32 %v1131, %v1101
          %v1133 = vadd.f32 %v1132, %v1102
          %v1134 = vadd.f32 %v1133, %v1103
          %v1135 = vadd.f32 %v1134, %v1104
          %v1136 = vadd.f32 %v1135, %v1105
          %v1137 = vadd.f32 %v1136, %v1106
          %v1138 = vadd.f32 %v1137, %v1107
          %v1139 = vadd.f32 %v1138, %v1108
          %v1140 = vadd.f32 %v1139, %v1109
          %v1141 = vadd.f32 %v1140, %v1110
          %v1142 = vadd.f32 %v1141, %v1111
          %v1143 = vadd.f32 %v1142, %v1112
          %v1144 = vadd.f32 %v1143, %v1113
          %v1145 = vadd.f32 %v1144, %v1114
          %v1146 = vadd.f32 %v1145, %v1115
          %v1147 = vadd.f32 %v1146, %v1116
          %v1148 = vadd.f32 %v1147, %v1117
          %v1149 = vadd.f32 %v1148, %v1118
          %1150 = vst [vmem:[#allocation6] sm:$0xff] %v1149
        $region44: #{tpu_custom_call.1} parent=23 // pred_fallthru
          _
        // Predicated region
        $region45: #{tpu_custom_call.1} parent=23 // pred_check
          %p1151 = pneg %p80
        $region46: #{tpu_custom_call.1} parent=23 // pred_check_branch
          %1153 = sbr.rel (%p1151) target = $region48
        $region47: #{tpu_custom_call.1} parent=23 // pred_region
          %s1155 = ssub.s32 128, 128
          %1156 = vsyncadd [#allocation5], %s1155
          %s1157 = smul.addr %s20, 128
          %s1158 = scalar_lea.hbm %s1, %s1157
          %s1160 = sshll.u32 [#allocation6], 4
          %s1161 = int_to_ptr.vmem [resolvable:$true] %s1160
          %1163 = dma.vmem_to_hbm [thread:$0]  %s1161, 128, %s1158, [#allocation5]
        $region48: #{tpu_custom_call.1} parent=23 // pred_fallthru
          _
        // Predicated region
        $region49: #{tpu_custom_call.1} parent=23 // pred_check
          %p1164 = pneg %p80
        $region50: #{tpu_custom_call.1} parent=23 // pred_check_branch
          %1166 = sbr.rel (%p1164) target = $region52
        $region51: #{tpu_custom_call.1} parent=23 // pred_region
          %1167 = dma.done [#allocation5], 128
        $region52: #{tpu_custom_call.1} parent=23 // pred_fallthru
          _
      $region24: #{tpu_custom_call.1} parent=5 // pred_fallthru
        _
      %p1168 = scmp.le.s32.totalorder 2, %s11
      // Predicated region
      $region53: #{tpu_custom_call.1} parent=5 // pred_check
        %p1169 = pneg %p1168
      $region54: #{tpu_custom_call.1} parent=5 // pred_check_branch
        %1171 = sbr.rel (%p1169) target = $region56
      $region55: #{tpu_custom_call.1} parent=5 // pred_region
        %s1172 = ssub.s32 %s11, 2
      $region56: #{tpu_custom_call.1} parent=5 // pred_fallthru
        _
    $region6: #{tpu_custom_call.1} parent=1 // loop_footer
      %s15 = sadd.s32 1, %s11
    $region7: #{tpu_custom_call.1} parent=1 // loop_footer_branch
      %10 = sbr.rel target = $region3
    $region8: #{tpu_custom_call.1} parent=1 // loop_exit
      _
    %1173 = vsyncpa [#allocation4], 1
    %s1174 = scalar_lea.sflag [#allocation4], 1
    %1175 = vsyncpa %s1174, 1
    %1176 = vsyncpa [#allocation5], 1
    %s1177 = scalar_lea.sflag [#allocation5], 1
    %1178 = vsyncpa %s1177, 1

</llo_original>
